<compile_context>
chip_gen: v7x
topology: tpu7x:2x2x1
jax: 0.10.0
libtpu: 0.0.40
codegen_flags: <defaults>
</compile_context>

<pallas_src>
import numpy as np
import jax
import jax.numpy as jnp
from jax.experimental import pallas as pl
from jax.experimental.pallas import tpu as pltpu

# ---------------- module hyper-parameters (from __init__) ----------------
EDGE_FEATURES = 128
NUM_POS_EMB = 16
NUM_RBF = 16
TOP_K = 30
MAX_REL = 32                                  # max_relative_feature
POS_IN = 2 * MAX_REL + 1 + 1                  # 66  (one-hot width)
EDGE_IN = NUM_POS_EMB + NUM_RBF * 25          # 416 (edge_embedding input)
RBF_WIDTH = 25 * NUM_RBF                      # 400
NUM_DIST = 25                                 # dnbr + 24 atom-pair distances
PACK_W = NUM_DIST + 1                         # 26: dnbr | d24[24] | dpos

# atom order N=0, Ca=1, C=2, O=3, Cb=4; the 24 (A, B) pairs in the exact order
# the PyTorch forward appends them (block 0, the masked Ca-Ca top-k distance,
# is prepended separately).
PAIRS = [
    (0, 0), (2, 2), (3, 3), (4, 4),           # N-N, C-C, O-O, Cb-Cb
    (1, 0), (1, 2), (1, 3), (1, 4),           # Ca-N, Ca-C, Ca-O, Ca-Cb
    (0, 2), (0, 3), (0, 4),                   # N-C, N-O, N-Cb
    (4, 2), (4, 3), (3, 2),                   # Cb-C, Cb-O, O-C
    (0, 1), (2, 1), (3, 1), (4, 1),           # N-Ca, C-Ca, O-Ca, Cb-Ca
    (2, 0), (3, 0), (4, 0),                   # C-N, O-N, Cb-N
    (2, 4), (3, 4), (2, 3),                   # C-Cb, O-Cb, C-O
]

_RBF_MU = np.linspace(2.0, 22.0, NUM_RBF).astype(np.float32)   # torch.linspace(2,22,16)
_RBF_INV_SIGMA = float(NUM_RBF) / (22.0 - 2.0)                 # 1 / D_sigma = 0.8
# 1/sigma folded into the mu immediates (no per-tile [T,400] scale multiply).
_SCALED_MU = tuple(float(m) * _RBF_INV_SIGMA for m in _RBF_MU)

# The kernel builds the 400 RBF lanes k-major (lane j = k*25 + p); the torch
# feature order is pair-major (p*16 + k).  Permute W_edge's RBF rows to match.
_KMAJOR_PERM = np.arange(RBF_WIDTH).reshape(NUM_DIST, NUM_RBF).T.reshape(-1)


# ------------------------------ Pallas kernel ------------------------------
def edge_feature_kernel(x_ref, wpos_ref, bfused_ref, wrbf_ref,
                        gamma_ref, beta_ref, out_ref):
    # x_ref : [T, 26]  (masked Ca-Ca top-k dist | 24 pair distances | dpos)
    # out   : [T, 128] LayerNormed edge embeddings
    x = x_ref[...]
    T = x.shape[0]

    # ---- 25x16 RBF expansion without touching the MXU -------------------
    # k-major layout: lane j = k*25 + p  ->  exp(-(((d_p - mu_k)/sigma)^2)).
    # 16 scalar broadcast-subtracts over [T,25] + one lane concat (VPU/XLU),
    # then a SINGLE f32 exp on [T,400] (EUP).
    d_scaled = x[:, 0:NUM_DIST] * _RBF_INV_SIGMA                  # [T, 25]
    z = jnp.concatenate([d_scaled - mu_k for mu_k in _SCALED_MU], axis=-1)
    rbf_all = jnp.exp(-(z * z))                                   # [T, 400] f32

    # ---- positional one-hot (folded linear: W_pos_fused = W_pos@W_edge[:16])
    dpos = x[:, NUM_DIST:NUM_DIST + 1].astype(jnp.int32)          # exact ints
    iota = jax.lax.broadcasted_iota(jnp.int32, (T, POS_IN), 1)
    onehot = (dpos == iota).astype(jnp.float32)                   # [T, 66]

    # ---- fused edge embedding: E = onehot@Wpf + rbf@W_rbf + b_fused -------
    # Operands intentionally kept f32 / DEFAULT precision: matches the XLA
    # reference numerics and the f32 PyTorch module within 2e-3.  Explicit
    # bf16 operand casts are the next MXU lever if the accuracy budget allows.
    E = (jnp.dot(onehot, wpos_ref[...], preferred_element_type=jnp.float32)
         + jnp.dot(rbf_all, wrbf_ref[...], preferred_element_type=jnp.float32)
         + bfused_ref[...])                                       # [T, 128]

    # ---- LayerNorm over channels (eps=1e-5, affine), centered variance ----
    inv_c = 1.0 / float(EDGE_FEATURES)
    m = jnp.sum(E, axis=-1, keepdims=True) * inv_c
    c = E - m
    v = jnp.sum(c * c, axis=-1, keepdims=True) * inv_c
    out_ref[...] = c * jax.lax.rsqrt(v + 1e-5) * gamma_ref[...] + beta_ref[...]


def _run_edge_kernel(packed, fused, tile_rows=1024):
    M = packed.shape[0]
    # Adaptive tile: large tiles amortize the ~0.35us/step pipeline overhead,
    # but keep >= 2 grid steps whenever there is enough work so both v7x
    # TensorCores get a share (dimension_semantics=("parallel",)).
    half = (((M + 1) // 2 + 7) // 8) * 8
    tile_rows = max(8, min(int(tile_rows), half))
    grid = (pl.cdiv(M, tile_rows),)   # ragged tail handled by Pallas masking

    def const(shape):
        return pl.BlockSpec(shape, lambda i: (0, 0))

    return pl.pallas_call(
        edge_feature_kernel,
        out_shape=jax.ShapeDtypeStruct((M, EDGE_FEATURES), jnp.float32),
        grid=grid,
        in_specs=[
            pl.BlockSpec((tile_rows, PACK_W), lambda i: (i, 0)),   # packed rows
            const((POS_IN, EDGE_FEATURES)),                        # W_pos_fused [66,128]
            const((1, EDGE_FEATURES)),                             # b_fused
            const((RBF_WIDTH, EDGE_FEATURES)),                     # W_rbf (k-major) [400,128]
            const((1, EDGE_FEATURES)),                             # gamma
            const((1, EDGE_FEATURES)),                             # beta
        ],
        out_specs=pl.BlockSpec((tile_rows, EDGE_FEATURES), lambda i: (i, 0)),
        compiler_params=pltpu.CompilerParams(
            dimension_semantics=("parallel",),
            vmem_limit_bytes=48 * 1024 * 1024),  # headroom under v7x's 64 MiB
    )(packed, fused["w_pos_fused"], fused["b_fused"], fused["w_rbf"],
      fused["gamma"], fused["beta"])


# ------------------------------ JAX glue ------------------------------
def _virtual_atoms(X):
    """N, Ca, C, O + virtual Cb stacked as [B, L, 5, 3]."""
    b = X[:, :, 1] - X[:, :, 0]
    c = X[:, :, 2] - X[:, :, 1]
    a = jnp.cross(b, c)
    Ca = X[:, :, 1]
    Cb = -0.58273431 * a + 0.56802827 * b - 0.54067466 * c + Ca
    return jnp.stack([X[:, :, 0], Ca, X[:, :, 2], X[:, :, 3], Cb], axis=2)


def _dist_topk(Ca, mask, top_k):
    """Masked pairwise Ca distances + top-k smallest (PyTorch _dist)."""
    mask_2D = mask[:, None, :] * mask[:, :, None]
    dX = Ca[:, None, :, :] - Ca[:, :, None, :]
    D = mask_2D * jnp.sqrt(jnp.sum(dX * dX, axis=-1) + 1e-6)
    D_max = jnp.max(D, axis=-1, keepdims=True)
    D_adjust = D + (1.0 - mask_2D) * D_max
    K = int(min(top_k, Ca.shape[1]))
    # TODO(synk): torch.topk(largest=False) via lax.top_k on negated values;
    # data-dependent top-k selection has no clean Pallas equivalent.
    neg_vals, E_idx = jax.lax.top_k(-D_adjust, K)
    return -neg_vals, E_idx


def _prepare_rows(X, mask, residue_idx, chain_labels, top_k=TOP_K):
    """Neighbour selection + gathers + exact-f32 pair distances (XLA glue)."""
    B, L = X.shape[:2]
    X = X.astype(jnp.float32)
    mask = mask.astype(jnp.float32)

    atoms = _virtual_atoms(X)                                      # [B, L, 5, 3]
    D_neighbors, E_idx = _dist_topk(atoms[:, :, 1], mask, top_k)   # Ca distances
    K = E_idx.shape[-1]

    # gather neighbour atoms, then exact f32 distances for the 24 atom pairs
    # (elementwise work that XLA fuses with the gather/pack pass; no query-atom
    #  replication is ever written to HBM).
    atoms_n = jax.vmap(lambda at, idx: at[idx])(atoms, E_idx)      # [B, L, K, 5, 3]
    ia = np.array([p[0] for p in PAIRS])
    ib = np.array([p[1] for p in PAIRS])
    aq = atoms[:, :, ia, :][:, :, None, :, :]                      # [B, L, 1, 24, 3]
    an = atoms_n[:, :, :, ib, :]                                   # [B, L, K, 24, 3]
    d24 = jnp.sqrt(jnp.sum((aq - an) ** 2, axis=-1) + 1e-6)        # [B, L, K, 24]

    # relative-position / same-chain features
    offset = residue_idx[:, :, None] - residue_idx[:, None, :]
    offset_n = jnp.take_along_axis(offset, E_idx, axis=2)          # [B, L, K]
    d_chains = (chain_labels[:, :, None] == chain_labels[:, None, :]).astype(jnp.int32)
    E_chains = jnp.take_along_axis(d_chains, E_idx, axis=2)
    d_pos = (jnp.clip(offset_n + MAX_REL, 0, 2 * MAX_REL) * E_chains
             + (1 - E_chains) * (2 * MAX_REL + 1))

    M = B * L * K
    packed = jnp.concatenate([
        D_neighbors.reshape(M, 1),
        d24.reshape(M, 24),
        d_pos.reshape(M, 1).astype(jnp.float32),       # small exact ints as f32
    ], axis=-1)                                        # [M, 26]
    return packed, E_idx, (B, L, K)


def _fuse_params(params):
    w_edge = params["w_edge"].astype(jnp.float32)
    # positional encoder folded into the edge matmul (exact fold in f32)
    w_pos_fused = jnp.matmul(params["w_pos"], w_edge[:NUM_POS_EMB],
                             precision=jax.lax.Precision.HIGHEST)   # [66, 128]
    b_fused = jnp.matmul(params["b_pos"], w_edge[:NUM_POS_EMB],
                         precision=jax.lax.Precision.HIGHEST)       # [1, 128]
    w_rbf = w_edge[NUM_POS_EMB:][_KMAJOR_PERM]                      # k-major rows
    return dict(
        w_pos_fused=w_pos_fused,
        b_fused=b_fused,
        w_rbf=w_rbf,
        gamma=params["gamma"].astype(jnp.float32),
        beta=params["beta"].astype(jnp.float32),
    )


def protein_features(X, mask, residue_idx, chain_labels, params, tile_rows=1024):
    packed, E_idx, (B, L, K) = _prepare_rows(X, mask, residue_idx, chain_labels)
    E = _run_edge_kernel(packed, _fuse_params(params), tile_rows=tile_rows)
    return E.reshape(B, L, K, EDGE_FEATURES), E_idx


# --------------------- pure-JAX reference (PyTorch forward) ---------------------
def _rbf_ref(D):
    mu = jnp.asarray(_RBF_MU).reshape((1,) * D.ndim + (-1,))
    sigma = (22.0 - 2.0) / NUM_RBF
    return jnp.exp(-(((D[..., None] - mu) / sigma) ** 2))


def protein_features_ref(X, mask, residue_idx, chain_labels, params, top_k=TOP_K):
    """Direct JAX translation of the PyTorch forward (O(L^2) per atom pair)."""
    X = X.astype(jnp.float32)
    mask = mask.astype(jnp.float32)
    atoms = _virtual_atoms(X)
    D_neighbors, E_idx = _dist_topk(atoms[:, :, 1], mask, top_k)

    def get_rbf(A, Bv):
        Dab = jnp.sqrt(jnp.sum((A[:, :, None, :] - Bv[:, None, :, :]) ** 2, -1) + 1e-6)
        return _rbf_ref(jnp.take_along_axis(Dab, E_idx, axis=2))

    rbf_all = [_rbf_ref(D_neighbors)]
    for pa, pb in PAIRS:
        rbf_all.append(get_rbf(atoms[:, :, pa], atoms[:, :, pb]))
    RBF_all = jnp.concatenate(rbf_all, axis=-1)                    # [B, L, K, 400]

    offset = residue_idx[:, :, None] - residue_idx[:, None, :]
    offset_n = jnp.take_along_axis(offset, E_idx, axis=2)
    d_chains = (chain_labels[:, :, None] == chain_labels[:, None, :]).astype(jnp.int32)
    E_chains = jnp.take_along_axis(d_chains, E_idx, axis=2)
    d = (jnp.clip(offset_n + MAX_REL, 0, 2 * MAX_REL) * E_chains
         + (1 - E_chains) * (2 * MAX_REL + 1))
    onehot = jax.nn.one_hot(d, POS_IN, dtype=jnp.float32)
    E_pos = onehot @ params["w_pos"] + params["b_pos"]

    E = jnp.concatenate([E_pos, RBF_all], axis=-1) @ params["w_edge"]
    m = jnp.mean(E, axis=-1, keepdims=True)
    v = jnp.mean((E - m) ** 2, axis=-1, keepdims=True)
    E = (E - m) * jax.lax.rsqrt(v + 1e-5) * params["gamma"] + params["beta"]
    return E, E_idx


# ------------------------------ params ------------------------------
def init_params(key):
    k1, k2, k3 = jax.random.split(key, 3)
    return dict(
        # PositionalEncodings.linear: Linear(66, 16) -> stored as [in, out]
        w_pos=(jax.random.normal(k1, (POS_IN, NUM_POS_EMB), jnp.float32) * 0.1),
        b_pos=(jax.random.normal(k2, (1, NUM_POS_EMB), jnp.float32) * 0.1),
        # edge_embedding: Linear(416, 128, bias=False) -> stored as [in, out]
        w_edge=(jax.random.normal(k3, (EDGE_IN, EDGE_FEATURES), jnp.float32) * 0.05),
        # norm_edges: LayerNorm(128) default init
        gamma=jnp.ones((1, EDGE_FEATURES), jnp.float32),
        beta=jnp.zeros((1, EDGE_FEATURES), jnp.float32),
    )


# ------------------------------ demo ------------------------------
if __name__ == "__main__":
    key = jax.random.PRNGKey(0)
    kx, kp = jax.random.split(key)

    B, L = 2, 8                                    # K = min(TOP_K, L) = 8 -> M = 128
    X = jax.random.normal(kx, (B, L, 4, 3), jnp.float32) * 3.0
    mask = jnp.ones((B, L), jnp.float32)
    residue_idx = jnp.broadcast_to(jnp.arange(L, dtype=jnp.int32), (B, L))
    chain_labels = jnp.concatenate(
        [jnp.zeros((B, L // 2), jnp.int32), jnp.ones((B, L - L // 2), jnp.int32)],
        axis=1)

    params = init_params(kp)

    E, E_idx = protein_features(X, mask, residue_idx, chain_labels, params)
    jax.block_until_ready(E)

    E_ref, E_idx_ref = protein_features_ref(X, mask, residue_idx, chain_labels, params)
    np.testing.assert_array_equal(np.asarray(E_idx), np.asarray(E_idx_ref))
    np.testing.assert_allclose(np.asarray(E), np.asarray(E_ref), rtol=2e-3, atol=2e-3)

    print("KERNEL_OK")
</pallas_src>

<mosaic_0001>
module attributes {stable_mosaic.version = 11 : i64} {
  func.func @edge_feature_kernel(%arg0: i32, %arg1: memref<64x26xf32, #tpu.memory_space<vmem>>, %arg2: memref<66x128xf32, #tpu.memory_space<vmem>>, %arg3: memref<1x128xf32, #tpu.memory_space<vmem>>, %arg4: memref<400x128xf32, #tpu.memory_space<vmem>>, %arg5: memref<1x128xf32, #tpu.memory_space<vmem>>, %arg6: memref<1x128xf32, #tpu.memory_space<vmem>>, %arg7: memref<64x128xf32, #tpu.memory_space<vmem>>) attributes {dimension_semantics = [#tpu.dimension_semantics<parallel>], iteration_bounds = array<i64: 2>, scalar_prefetch = 0 : i64, scratch_operands = 0 : i64, tpu.core_type = #tpu.core_type<tc>, window_params = [{transform_indices = @transform_0, window_bounds = array<i64: 64, 26>}, {pipeline_mode = #tpu.pipeline_mode<synchronous>, transform_indices = @transform_1, window_bounds = array<i64: 66, 128>}, {pipeline_mode = #tpu.pipeline_mode<synchronous>, transform_indices = @transform_2, window_bounds = array<i64: 1, 128>}, {pipeline_mode = #tpu.pipeline_mode<synchronous>, transform_indices = @transform_3, window_bounds = array<i64: 400, 128>}, {pipeline_mode = #tpu.pipeline_mode<synchronous>, transform_indices = @transform_4, window_bounds = array<i64: 1, 128>}, {pipeline_mode = #tpu.pipeline_mode<synchronous>, transform_indices = @transform_5, window_bounds = array<i64: 1, 128>}, {transform_indices = @transform_6, window_bounds = array<i64: 64, 128>}]} {
    %c0 = arith.constant 0 : index
    %c0_0 = arith.constant 0 : index
    %0 = vector.load %arg1[%c0, %c0_0] : memref<64x26xf32, #tpu.memory_space<vmem>>, vector<64x26xf32>
    %1 = vector.extract_strided_slice %0 {offsets = [0, 0], sizes = [64, 25], strides = [1, 1]} : vector<64x26xf32> to vector<64x25xf32>
    %cst = arith.constant 8.000000e-01 : f32
    %2 = vector.broadcast %cst : f32 to vector<64x25xf32>
    %3 = arith.mulf %1, %2 : vector<64x25xf32>
    %cst_1 = arith.constant 1.600000e+00 : f32
    %4 = vector.broadcast %cst_1 : f32 to vector<64x25xf32>
    %5 = arith.subf %3, %4 : vector<64x25xf32>
    %cst_2 = arith.constant 2.66666651 : f32
    %6 = vector.broadcast %cst_2 : f32 to vector<64x25xf32>
    %7 = arith.subf %3, %6 : vector<64x25xf32>
    %cst_3 = arith.constant 3.73333311 : f32
    %8 = vector.broadcast %cst_3 : f32 to vector<64x25xf32>
    %9 = arith.subf %3, %8 : vector<64x25xf32>
    %cst_4 = arith.constant 4.800000e+00 : f32
    %10 = vector.broadcast %cst_4 : f32 to vector<64x25xf32>
    %11 = arith.subf %3, %10 : vector<64x25xf32>
    %cst_5 = arith.constant 5.86666679 : f32
    %12 = vector.broadcast %cst_5 : f32 to vector<64x25xf32>
    %13 = arith.subf %3, %12 : vector<64x25xf32>
    %cst_6 = arith.constant 6.93333339 : f32
    %14 = vector.broadcast %cst_6 : f32 to vector<64x25xf32>
    %15 = arith.subf %3, %14 : vector<64x25xf32>
    %cst_7 = arith.constant 8.000000e+00 : f32
    %16 = vector.broadcast %cst_7 : f32 to vector<64x25xf32>
    %17 = arith.subf %3, %16 : vector<64x25xf32>
    %cst_8 = arith.constant 9.0666666 : f32
    %18 = vector.broadcast %cst_8 : f32 to vector<64x25xf32>
    %19 = arith.subf %3, %18 : vector<64x25xf32>
    %cst_9 = arith.constant 10.1333332 : f32
    %20 = vector.broadcast %cst_9 : f32 to vector<64x25xf32>
    %21 = arith.subf %3, %20 : vector<64x25xf32>
    %cst_10 = arith.constant 1.120000e+01 : f32
    %22 = vector.broadcast %cst_10 : f32 to vector<64x25xf32>
    %23 = arith.subf %3, %22 : vector<64x25xf32>
    %cst_11 = arith.constant 12.2666664 : f32
    %24 = vector.broadcast %cst_11 : f32 to vector<64x25xf32>
    %25 = arith.subf %3, %24 : vector<64x25xf32>
    %cst_12 = arith.constant 13.333333 : f32
    %26 = vector.broadcast %cst_12 : f32 to vector<64x25xf32>
    %27 = arith.subf %3, %26 : vector<64x25xf32>
    %cst_13 = arith.constant 1.440000e+01 : f32
    %28 = vector.broadcast %cst_13 : f32 to vector<64x25xf32>
    %29 = arith.subf %3, %28 : vector<64x25xf32>
    %cst_14 = arith.constant 15.4666672 : f32
    %30 = vector.broadcast %cst_14 : f32 to vector<64x25xf32>
    %31 = arith.subf %3, %30 : vector<64x25xf32>
    %cst_15 = arith.constant 16.5333328 : f32
    %32 = vector.broadcast %cst_15 : f32 to vector<64x25xf32>
    %33 = arith.subf %3, %32 : vector<64x25xf32>
    %cst_16 = arith.constant 1.760000e+01 : f32
    %34 = vector.broadcast %cst_16 : f32 to vector<64x25xf32>
    %35 = arith.subf %3, %34 : vector<64x25xf32>
    %36 = tpu.concatenate %5, %7, %9, %11, %13, %15, %17, %19, %21, %23, %25, %27, %29, %31, %33, %35 in 1 : vector<64x25xf32>, vector<64x25xf32>, vector<64x25xf32>, vector<64x25xf32>, vector<64x25xf32>, vector<64x25xf32>, vector<64x25xf32>, vector<64x25xf32>, vector<64x25xf32>, vector<64x25xf32>, vector<64x25xf32>, vector<64x25xf32>, vector<64x25xf32>, vector<64x25xf32>, vector<64x25xf32>, vector<64x25xf32> -> vector<64x400xf32>
    %37 = arith.mulf %36, %36 : vector<64x400xf32>
    %cst_17 = arith.constant 0.000000e+00 : f32
    %38 = vector.broadcast %cst_17 : f32 to vector<64x400xf32>
    %39 = arith.subf %38, %37 : vector<64x400xf32>
    %40 = math.exp %39 : vector<64x400xf32>
    %41 = vector.extract_strided_slice %0 {offsets = [0, 25], sizes = [64, 1], strides = [1, 1]} : vector<64x26xf32> to vector<64x1xf32>
    %42 = arith.fptosi %41 : vector<64x1xf32> to vector<64x1xi32>
    %43 = tpu.iota {dimensions = array<i32: 1>} : vector<64x66xi32>
    %44 = vector.broadcast %42 : vector<64x1xi32> to vector<64x66xi32>
    %45 = arith.cmpi eq, %44, %43 : vector<64x66xi32>
    %46 = arith.extui %45 : vector<64x66xi1> to vector<64x66xi32>
    %47 = arith.sitofp %46 : vector<64x66xi32> to vector<64x66xf32>
    %c0_18 = arith.constant 0 : index
    %c0_19 = arith.constant 0 : index
    %48 = vector.load %arg2[%c0_18, %c0_19] : memref<66x128xf32, #tpu.memory_space<vmem>>, vector<66x128xf32>
    %cst_20 = arith.constant dense<0.000000e+00> : vector<64x128xf32>
    %49 = tpu.matmul %47, %48, %cst_20 {dimension_numbers = #tpu.dot_dimension_numbers<[1], [0], [0], [1], [0, 0, 1, 1], [], []>} : vector<64x66xf32>, vector<66x128xf32>, vector<64x128xf32> -> vector<64x128xf32>
    %c0_21 = arith.constant 0 : index
    %c0_22 = arith.constant 0 : index
    %50 = vector.load %arg4[%c0_21, %c0_22] : memref<400x128xf32, #tpu.memory_space<vmem>>, vector<400x128xf32>
    %cst_23 = arith.constant dense<0.000000e+00> : vector<64x128xf32>
    %51 = tpu.matmul %40, %50, %cst_23 {dimension_numbers = #tpu.dot_dimension_numbers<[1], [0], [0], [1], [0, 0, 1, 1], [], []>} : vector<64x400xf32>, vector<400x128xf32>, vector<64x128xf32> -> vector<64x128xf32>
    %52 = arith.addf %49, %51 : vector<64x128xf32>
    %c0_24 = arith.constant 0 : index
    %c0_25 = arith.constant 0 : index
    %53 = vector.load %arg3[%c0_24, %c0_25] : memref<1x128xf32, #tpu.memory_space<vmem>>, vector<1x128xf32>
    %54 = vector.broadcast %53 : vector<1x128xf32> to vector<64x128xf32>
    %55 = arith.addf %52, %54 : vector<64x128xf32>
    %cst_26 = arith.constant dense<0.000000e+00> : vector<64xf32>
    %56 = vector.multi_reduction <add>, %55, %cst_26 [1] : vector<64x128xf32> to vector<64xf32>
    %57 = vector.shape_cast %56 : vector<64xf32> to vector<64x1xf32>
    %cst_27 = arith.constant 7.812500e-03 : f32
    %58 = vector.broadcast %cst_27 : f32 to vector<64x1xf32>
    %59 = arith.mulf %57, %58 : vector<64x1xf32>
    %60 = vector.broadcast %59 : vector<64x1xf32> to vector<64x128xf32>
    %61 = arith.subf %55, %60 : vector<64x128xf32>
    %62 = arith.mulf %61, %61 : vector<64x128xf32>
    %cst_28 = arith.constant dense<0.000000e+00> : vector<64xf32>
    %63 = vector.multi_reduction <add>, %62, %cst_28 [1] : vector<64x128xf32> to vector<64xf32>
    %64 = vector.shape_cast %63 : vector<64xf32> to vector<64x1xf32>
    %cst_29 = arith.constant 7.812500e-03 : f32
    %65 = vector.broadcast %cst_29 : f32 to vector<64x1xf32>
    %66 = arith.mulf %64, %65 : vector<64x1xf32>
    %cst_30 = arith.constant 9.99999974E-6 : f32
    %67 = vector.broadcast %cst_30 : f32 to vector<64x1xf32>
    %68 = arith.addf %66, %67 : vector<64x1xf32>
    %69 = math.rsqrt %68 : vector<64x1xf32>
    %70 = vector.broadcast %69 : vector<64x1xf32> to vector<64x128xf32>
    %71 = arith.mulf %61, %70 : vector<64x128xf32>
    %c0_31 = arith.constant 0 : index
    %c0_32 = arith.constant 0 : index
    %72 = vector.load %arg5[%c0_31, %c0_32] : memref<1x128xf32, #tpu.memory_space<vmem>>, vector<1x128xf32>
    %73 = vector.broadcast %72 : vector<1x128xf32> to vector<64x128xf32>
    %74 = arith.mulf %71, %73 : vector<64x128xf32>
    %c0_33 = arith.constant 0 : index
    %c0_34 = arith.constant 0 : index
    %75 = vector.load %arg6[%c0_33, %c0_34] : memref<1x128xf32, #tpu.memory_space<vmem>>, vector<1x128xf32>
    %76 = vector.broadcast %75 : vector<1x128xf32> to vector<64x128xf32>
    %77 = arith.addf %74, %76 : vector<64x128xf32>
    %c0_35 = arith.constant 0 : index
    %c0_36 = arith.constant 0 : index
    %78 = vector.load %arg7[%c0_35, %c0_36] : memref<64x128xf32, #tpu.memory_space<vmem>>, vector<64x128xf32>
    tpu.vector_store %arg7[%c0_35, %c0_36], %77 {strides = array<i32>} : memref<64x128xf32, #tpu.memory_space<vmem>>, vector<64x128xf32>,
    return
  }
  func.func @transform_0(%arg0: i32) -> (i32, i32) {
    %c0_i32 = arith.constant 0 : i32
    %c0_i32_0 = arith.constant 0 : i32
    return %arg0, %c0_i32 : i32, i32
  }
  func.func @transform_1(%arg0: i32) -> (i32, i32) {
    %c0_i32 = arith.constant 0 : i32
    %c0_i32_0 = arith.constant 0 : i32
    %c0_i32_1 = arith.constant 0 : i32
    return %c0_i32, %c0_i32_0 : i32, i32
  }
  func.func @transform_2(%arg0: i32) -> (i32, i32) {
    %c0_i32 = arith.constant 0 : i32
    %c0_i32_0 = arith.constant 0 : i32
    %c0_i32_1 = arith.constant 0 : i32
    return %c0_i32, %c0_i32_0 : i32, i32
  }
  func.func @transform_3(%arg0: i32) -> (i32, i32) {
    %c0_i32 = arith.constant 0 : i32
    %c0_i32_0 = arith.constant 0 : i32
    %c0_i32_1 = arith.constant 0 : i32
    return %c0_i32, %c0_i32_0 : i32, i32
  }
  func.func @transform_4(%arg0: i32) -> (i32, i32) {
    %c0_i32 = arith.constant 0 : i32
    %c0_i32_0 = arith.constant 0 : i32
    %c0_i32_1 = arith.constant 0 : i32
    return %c0_i32, %c0_i32_0 : i32, i32
  }
  func.func @transform_5(%arg0: i32) -> (i32, i32) {
    %c0_i32 = arith.constant 0 : i32
    %c0_i32_0 = arith.constant 0 : i32
    %c0_i32_1 = arith.constant 0 : i32
    return %c0_i32, %c0_i32_0 : i32, i32
  }
  func.func @transform_6(%arg0: i32) -> (i32, i32) {
    %c0_i32 = arith.constant 0 : i32
    %c0_i32_0 = arith.constant 0 : i32
    return %arg0, %c0_i32 : i32, i32
  }
}

</mosaic_0001>

<llo_original>
// kernel: tpu_custom_call.1
$region0: #{tpu_custom_call.1}
  #allocation0 [shape = 'u32[]', space=smem, size = 0x4, offset = 0x4, fixed_abs, tag = 'smem constant byte address 0x4 - core index']
  #allocation1 [shape = 'u32[144,128]{1,0:T(1,128)}', space=vmem, size = 0x12000, scoped, tag = 'internal scratch']
  %s0 = inlined_call_operand.vmem [shape: f32[128,26], index: 0, kind: input, shape index: {}]
  %s1 = inlined_call_operand.vmem [shape: f32[66,128], index: 1, kind: input, shape index: {}]
  %s2 = inlined_call_operand.vmem [shape: f32[1,128], index: 2, kind: input, shape index: {}]
  %s3 = inlined_call_operand.hbm [shape: f32[400,128], index: 3, kind: input, shape index: {}]
  %s4 = inlined_call_operand.vmem [shape: f32[1,128], index: 4, kind: input, shape index: {}]
  %s5 = inlined_call_operand.vmem [shape: f32[1,128], index: 5, kind: input, shape index: {}]
  %s6 = inlined_call_operand.hbm [shape: f32[128,128], index: 6, kind: output, shape index: {}]
  %s7 = sld [smem:[#allocation0]]
  $region61: #{tpu_custom_call.1} parent=0
    _
  %s9 = ssub.s32 1, %s7
  %s10 = scalar_select 0, %s9, %s7
  $region1: #{tpu_custom_call.1} parent=0
    #allocation2 [shape = 'u8[204800]{0}', space=vmem, size = 0x32000, scoped, tag = 'input window, operand 3, single buffered']
    #allocation3 [shape = 's32[2]{0}', space=sflag, size = 0x8, scoped, tag = 'scoped memory for tpu_custom_call.1']
    #allocation4 [shape = 's32[2]{0}', space=sflag, size = 0x8, scoped, tag = 'scoped memory for tpu_custom_call.1']
    #allocation5 [shape = 'u8[65536]{0}', space=vmem, size = 0x10000, scoped, tag = 'output window, operand 0']
    %11 = vsyncpa [#allocation3], 0
    %12 = vsyncpa [#allocation4], 0
    %s13 = scalar_lea.sflag [#allocation4], 1
    %14 = vsyncpa %s13, 0
    loop: start=0, step=1, limit=4
    $region2: #{tpu_custom_call.1} parent=1 // loop_pre_header
      _
    $region3: #{tpu_custom_call.1} parent=1 // loop_header
      %s16 = sphi 0, %s20
      %p17 = scmp.ge.s32.totalorder %s16, 4
      %s26 = sphi 0, %s28
      %s29 = sphi 0, %s26
      %s30 = sphi 0, %s29
      %s46 = sphi 0, %s30
      %s50 = sphi 0, %s50
      %s52 = sphi 0, %s50
      %s53 = sphi 0, %s52
      %s67 = sphi 0, %s53
      %s71 = sphi 0, %s71
      %s73 = sphi 0, %s71
      %s74 = sphi 0, %s73
      %s88 = sphi 0, %s74
      %s92 = sphi 0, %s92
      %s94 = sphi 0, %s92
      %s95 = sphi 0, %s94
      %s109 = sphi 0, %s95
      %s113 = sphi 0, %s113
      %s115 = sphi 0, %s113
      %s116 = sphi 0, %s115
      %s130 = sphi 0, %s116
      %s134 = sphi 0, %s134
      %s136 = sphi 0, %s134
      %s137 = sphi 0, %s136
      %s151 = sphi 0, %s137
      %s157 = sphi 0, %s159
      %s160 = sphi 0, %s157
      %s161 = sphi 0, %s160
      %s177 = sphi 0, %s161
    $region4: #{tpu_custom_call.1} parent=1 // loop_header_branch
      %19 = sbr.rel (%p17) target = $region8
    $region5: #{tpu_custom_call.1} parent=1 // loop_body
      %s21 = ssub.s32 %s16, 1
      %s22 = ssub.s32 %s16, 2
      %s23 = sadd.s32 %s16, 1
      %s24 = ssub.s32 %s16, %s23
      %p25 = scmp.eq.s32.totalorder %s24, 0
      %s27 = sadd.s32 %s26, 1
      %s28 = scalar_select %p25, %s26, %s27
      %p31 = pneg %p25
      %p32 = scmp.eq.s32.totalorder %s16, 1
      %p33 = por %p31, %p32
      %p34 = scmp.ne.s32.totalorder %s26, %s29
      %p35 = scmp.eq.s32.totalorder %s16, 0
      %p36 = por %p34, %p35
      %p37 = scmp.ne.s32.totalorder %s26, %s29
      %p38 = scmp.eq.s32.totalorder %s21, 1
      %p39 = por %p37, %p38
      %p40 = scmp.ne.s32.totalorder %s29, %s30
      %p41 = scmp.eq.s32.totalorder %s21, 0
      %p42 = por %p40, %p41
      %p43 = scmp.ne.s32.totalorder %s29, %s30
      %p44 = scmp.eq.s32.totalorder %s22, 1
      %p45 = por %p43, %p44
      %p47 = scmp.ne.s32.totalorder %s30, %s46
      %p48 = scmp.eq.s32.totalorder %s22, 0
      %p49 = por %p47, %p48
      %s51 = sadd.s32 %s50, 1
      %p54 = scmp.eq.s32.totalorder %s16, 1
      %p55 = scmp.ne.s32.totalorder %s50, %s52
      %p56 = scmp.eq.s32.totalorder %s16, 0
      %p57 = por %p55, %p56
      %p58 = scmp.ne.s32.totalorder %s50, %s52
      %p59 = scmp.eq.s32.totalorder %s21, 1
      %p60 = por %p58, %p59
      %p61 = scmp.ne.s32.totalorder %s52, %s53
      %p62 = scmp.eq.s32.totalorder %s21, 0
      %p63 = por %p61, %p62
      %p64 = scmp.ne.s32.totalorder %s52, %s53
      %p65 = scmp.eq.s32.totalorder %s22, 1
      %p66 = por %p64, %p65
      %p68 = scmp.ne.s32.totalorder %s53, %s67
      %p69 = scmp.eq.s32.totalorder %s22, 0
      %p70 = por %p68, %p69
      %s72 = sadd.s32 %s71, 1
      %p75 = scmp.eq.s32.totalorder %s16, 1
      %p76 = scmp.ne.s32.totalorder %s71, %s73
      %p77 = scmp.eq.s32.totalorder %s16, 0
      %p78 = por %p76, %p77
      %p79 = scmp.ne.s32.totalorder %s71, %s73
      %p80 = scmp.eq.s32.totalorder %s21, 1
      %p81 = por %p79, %p80
      %p82 = scmp.ne.s32.totalorder %s73, %s74
      %p83 = scmp.eq.s32.totalorder %s21, 0
      %p84 = por %p82, %p83
      %p85 = scmp.ne.s32.totalorder %s73, %s74
      %p86 = scmp.eq.s32.totalorder %s22, 1
      %p87 = por %p85, %p86
      %p89 = scmp.ne.s32.totalorder %s74, %s88
      %p90 = scmp.eq.s32.totalorder %s22, 0
      %p91 = por %p89, %p90
      %s93 = sadd.s32 %s92, 1
      %p96 = scmp.eq.s32.totalorder %s16, 1
      %p97 = scmp.ne.s32.totalorder %s92, %s94
      %p98 = scmp.eq.s32.totalorder %s16, 0
      %p99 = por %p97, %p98
      %p100 = scmp.ne.s32.totalorder %s92, %s94
      %p101 = scmp.eq.s32.totalorder %s21, 1
      %p102 = por %p100, %p101
      %p103 = scmp.ne.s32.totalorder %s94, %s95
      %p104 = scmp.eq.s32.totalorder %s21, 0
      %p105 = por %p103, %p104
      %p106 = scmp.ne.s32.totalorder %s94, %s95
      %p107 = scmp.eq.s32.totalorder %s22, 1
      %p108 = por %p106, %p107
      %p110 = scmp.ne.s32.totalorder %s95, %s109
      %p111 = scmp.eq.s32.totalorder %s22, 0
      %p112 = por %p110, %p111
      %s114 = sadd.s32 %s113, 1
      %p117 = scmp.eq.s32.totalorder %s16, 1
      %p118 = scmp.ne.s32.totalorder %s113, %s115
      %p119 = scmp.eq.s32.totalorder %s16, 0
      %p120 = por %p118, %p119
      %p121 = scmp.ne.s32.totalorder %s113, %s115
      %p122 = scmp.eq.s32.totalorder %s21, 1
      %p123 = por %p121, %p122
      %p124 = scmp.ne.s32.totalorder %s115, %s116
      %p125 = scmp.eq.s32.totalorder %s21, 0
      %p126 = por %p124, %p125
      %p127 = scmp.ne.s32.totalorder %s115, %s116
      %p128 = scmp.eq.s32.totalorder %s22, 1
      %p129 = por %p127, %p128
      %p131 = scmp.ne.s32.totalorder %s116, %s130
      %p132 = scmp.eq.s32.totalorder %s22, 0
      %p133 = por %p131, %p132
      %s135 = sadd.s32 %s134, 1
      %p138 = scmp.eq.s32.totalorder %s16, 1
      %p139 = scmp.ne.s32.totalorder %s134, %s136
      %p140 = scmp.eq.s32.totalorder %s16, 0
      %p141 = por %p139, %p140
      %p142 = scmp.ne.s32.totalorder %s134, %s136
      %p143 = scmp.eq.s32.totalorder %s21, 1
      %p144 = por %p142, %p143
      %p145 = scmp.ne.s32.totalorder %s136, %s137
      %p146 = scmp.eq.s32.totalorder %s21, 0
      %p147 = por %p145, %p146
      %p148 = scmp.ne.s32.totalorder %s136, %s137
      %p149 = scmp.eq.s32.totalorder %s22, 1
      %p150 = por %p148, %p149
      %p152 = scmp.ne.s32.totalorder %s137, %s151
      %p153 = scmp.eq.s32.totalorder %s22, 0
      %p154 = por %p152, %p153
      %s155 = ssub.s32 %s16, %s23
      %p156 = scmp.eq.s32.totalorder %s155, 0
      %s158 = sadd.s32 %s157, 1
      %s159 = scalar_select %p156, %s157, %s158
      %p162 = pneg %p156
      %p163 = scmp.eq.s32.totalorder %s16, 1
      %p164 = por %p162, %p163
      %p165 = scmp.ne.s32.totalorder %s157, %s160
      %p166 = scmp.eq.s32.totalorder %s16, 0
      %p167 = por %p165, %p166
      %p168 = scmp.ne.s32.totalorder %s157, %s160
      %p169 = scmp.eq.s32.totalorder %s21, 1
      %p170 = por %p168, %p169
      %p171 = scmp.ne.s32.totalorder %s160, %s161
      %p172 = scmp.eq.s32.totalorder %s21, 0
      %p173 = por %p171, %p172
      %p174 = scmp.ne.s32.totalorder %s160, %s161
      %p175 = scmp.eq.s32.totalorder %s22, 1
      %p176 = por %p174, %p175
      %p178 = scmp.ne.s32.totalorder %s161, %s177
      %p179 = scmp.eq.s32.totalorder %s22, 0
      %p180 = por %p178, %p179
      %p181 = scmp.le.s32.totalorder 1, %s16
      %p182 = scmp.lt.s32.totalorder %s16, 3
      %p183 = pnand %p181, %p182
      %p184 = pneg %p183
      // Predicated region
      $region9: #{tpu_custom_call.1} parent=5 // pred_check
        _
      $region10: #{tpu_custom_call.1} parent=5 // pred_check_branch
        %186 = sbr.rel (%p183) target = $region12
      $region11: #{tpu_custom_call.1} parent=5 // pred_region
        %s187 = ssub.s32 %s16, 1
        // Predicated region
        $region13: #{tpu_custom_call.1} parent=11 // pred_check
          %p188 = pneg %p63
        $region14: #{tpu_custom_call.1} parent=11 // pred_check_branch
          %190 = sbr.rel (%p188) target = $region16
        $region15: #{tpu_custom_call.1} parent=11 // pred_region
          _
        $region16: #{tpu_custom_call.1} parent=11 // pred_fallthru
          _
        // Predicated region
        $region17: #{tpu_custom_call.1} parent=11 // pred_check
          %p191 = pneg %p84
        $region18: #{tpu_custom_call.1} parent=11 // pred_check_branch
          %193 = sbr.rel (%p191) target = $region20
        $region19: #{tpu_custom_call.1} parent=11 // pred_region
          _
        $region20: #{tpu_custom_call.1} parent=11 // pred_fallthru
          _
        // Predicated region
        $region21: #{tpu_custom_call.1} parent=11 // pred_check
          %p194 = pneg %p105
        $region22: #{tpu_custom_call.1} parent=11 // pred_check_branch
          %196 = sbr.rel (%p194) target = $region24
        $region23: #{tpu_custom_call.1} parent=11 // pred_region
          %s198 = ssub.s32 6400, 6400
          %199 = vsyncadd [#allocation3], %s198
          %s200 = sshll.u32 [#allocation2], 4
          %s201 = int_to_ptr.vmem [resolvable:$true] %s200
          %206 = dma.hbm_to_vmem [thread:$0]  %s3, 6400, %s201, [#allocation3], 128, 128, 8
        $region24: #{tpu_custom_call.1} parent=11 // pred_fallthru
          _
        // Predicated region
        $region25: #{tpu_custom_call.1} parent=11 // pred_check
          %p207 = pneg %p126
        $region26: #{tpu_custom_call.1} parent=11 // pred_check_branch
          %209 = sbr.rel (%p207) target = $region28
        $region27: #{tpu_custom_call.1} parent=11 // pred_region
          _
        $region28: #{tpu_custom_call.1} parent=11 // pred_fallthru
          _
        // Predicated region
        $region29: #{tpu_custom_call.1} parent=11 // pred_check
          %p210 = pneg %p147
        $region30: #{tpu_custom_call.1} parent=11 // pred_check_branch
          %212 = sbr.rel (%p210) target = $region32
        $region31: #{tpu_custom_call.1} parent=11 // pred_region
          _
        $region32: #{tpu_custom_call.1} parent=11 // pred_fallthru
          _
      $region12: #{tpu_custom_call.1} parent=5 // pred_fallthru
        _
      %p213 = scmp.lt.s32.totalorder %s16, 2
      // Predicated region
      $region33: #{tpu_custom_call.1} parent=5 // pred_check
        %p214 = pneg %p213
      $region34: #{tpu_custom_call.1} parent=5 // pred_check_branch
        %216 = sbr.rel (%p214) target = $region36
      $region35: #{tpu_custom_call.1} parent=5 // pred_region
        // Predicated region
        $region37: #{tpu_custom_call.1} parent=35 // pred_check
          %p217 = pneg %p36
        $region38: #{tpu_custom_call.1} parent=35 // pred_check_branch
          %219 = sbr.rel (%p217) target = $region40
        $region39: #{tpu_custom_call.1} parent=35 // pred_region
          %s220 = smul.u32 8, %s16
          %p221 = scmp.lt.s32.totalorder %s220, 15
          %s222 = scalar_select %p221, %s220, 15
          %s223 = smul.addr %s222, 8
          %s224 = scalar_lea.vmem %s0, %s223
          %s225 = smul.u32 8, %s16
        $region40: #{tpu_custom_call.1} parent=35 // pred_fallthru
          _
      $region36: #{tpu_custom_call.1} parent=5 // pred_fallthru
        _
      %p226 = scmp.le.s32.totalorder 1, %s16
      %p227 = scmp.lt.s32.totalorder %s16, 3
      %p228 = pnand %p226, %p227
      %p229 = pneg %p228
      // Predicated region
      $region41: #{tpu_custom_call.1} parent=5 // pred_check
        _
      $region42: #{tpu_custom_call.1} parent=5 // pred_check_branch
        %231 = sbr.rel (%p228) target = $region44
      $region43: #{tpu_custom_call.1} parent=5 // pred_region
        %s232 = ssub.s32 %s16, 1
        // Predicated region
        $region45: #{tpu_custom_call.1} parent=43 // pred_check
          %p233 = pneg %p105
        $region46: #{tpu_custom_call.1} parent=43 // pred_check_branch
          %235 = sbr.rel (%p233) target = $region48
        $region47: #{tpu_custom_call.1} parent=43 // pred_region
          %236 = dma.done [#allocation3], 6400
        $region48: #{tpu_custom_call.1} parent=43 // pred_fallthru
          _
        %s237 = smul.u32 8, %s21
        %p238 = scmp.lt.s32.totalorder %s237, 15
        %s239 = scalar_select %p238, %s237, 15
        %s240 = smul.addr %s239, 8
        %s241 = scalar_lea.vmem %s0, %s240
        %p242 = pneg %p42
        %p243 = pneg %p39
        %p244 = pneg %p63
        %p245 = pneg %p60
        %p246 = pneg %p84
        %p247 = pneg %p81
        %p248 = pneg %p105
        %p249 = pneg %p102
        %p250 = pneg %p126
        %p251 = pneg %p123
        %p252 = pneg %p147
        %p253 = pneg %p144
        %p254 = pneg %p173
        %p255 = pneg %p170
        %s256 = sand.u32 %s160, 1
        %s257 = scalar_lea.sflag [#allocation4], %s256
        %s258 = sand.u32 %s160, 1
        %s259 = smul.addr %s258, 64
        %s260 = scalar_lea.vmem [#allocation5], %s259
        %s261 = smul.u32 8, %s21
        %p262 = scmp.lt.s32.totalorder %s261, 15
        %s263 = scalar_select %p262, %s261, 15
        %s264 = smul.addr %s263, 8
        %s265 = scalar_lea.vmem %s0, %s264
        %s266 = smul.u32 8, %s21
        %s267 = smul.u32 8, %s21
        %v268 = vld [vmem:[%s265] sm:$0xff]
        %v269 = vld [vmem:[%s265 + $0x8] sm:$0xff]
        %v270 = vld [vmem:[%s265 + $0x10] sm:$0xff]
        %v271 = vld [vmem:[%s265 + $0x18] sm:$0xff]
        %v272 = vld [vmem:[%s265 + $0x20] sm:$0xff]
        %v273 = vld [vmem:[%s265 + $0x28] sm:$0xff]
        %v274 = vld [vmem:[%s265 + $0x30] sm:$0xff]
        %v275 = vld [vmem:[%s265 + $0x38] sm:$0xff]
        %v276 = vmul.f32 %v268, 0.8
        %v277 = vmul.f32 %v269, 0.8
        %v278 = vmul.f32 %v270, 0.8
        %v279 = vmul.f32 %v271, 0.8
        %v280 = vmul.f32 %v272, 0.8
        %v281 = vmul.f32 %v273, 0.8
        %v282 = vmul.f32 %v274, 0.8
        %v283 = vmul.f32 %v275, 0.8
        %v284 = vsub.f32 %v276, 1.6
        %v285 = vsub.f32 %v277, 1.6
        %v286 = vsub.f32 %v278, 1.6
        %v287 = vsub.f32 %v279, 1.6
        %v288 = vsub.f32 %v280, 1.6
        %v289 = vsub.f32 %v281, 1.6
        %v290 = vsub.f32 %v282, 1.6
        %v291 = vsub.f32 %v283, 1.6
        %v292 = vsub.f32 %v276, 2.6666665
        %v293 = vsub.f32 %v277, 2.6666665
        %v294 = vsub.f32 %v278, 2.6666665
        %v295 = vsub.f32 %v279, 2.6666665
        %v296 = vsub.f32 %v280, 2.6666665
        %v297 = vsub.f32 %v281, 2.6666665
        %v298 = vsub.f32 %v282, 2.6666665
        %v299 = vsub.f32 %v283, 2.6666665
        %v300 = vsub.f32 %v276, 3.733333
        %v301 = vsub.f32 %v277, 3.733333
        %v302 = vsub.f32 %v278, 3.733333
        %v303 = vsub.f32 %v279, 3.733333
        %v304 = vsub.f32 %v280, 3.733333
        %v305 = vsub.f32 %v281, 3.733333
        %v306 = vsub.f32 %v282, 3.733333
        %v307 = vsub.f32 %v283, 3.733333
        %v308 = vsub.f32 %v276, 4.8
        %v309 = vsub.f32 %v277, 4.8
        %v310 = vsub.f32 %v278, 4.8
        %v311 = vsub.f32 %v279, 4.8
        %v312 = vsub.f32 %v280, 4.8
        %v313 = vsub.f32 %v281, 4.8
        %v314 = vsub.f32 %v282, 4.8
        %v315 = vsub.f32 %v283, 4.8
        %v316 = vsub.f32 %v276, 5.866667
        %v317 = vsub.f32 %v277, 5.866667
        %v318 = vsub.f32 %v278, 5.866667
        %v319 = vsub.f32 %v279, 5.866667
        %v320 = vsub.f32 %v280, 5.866667
        %v321 = vsub.f32 %v281, 5.866667
        %v322 = vsub.f32 %v282, 5.866667
        %v323 = vsub.f32 %v283, 5.866667
        %v324 = vsub.f32 %v276, 6.9333334
        %v325 = vsub.f32 %v277, 6.9333334
        %v326 = vsub.f32 %v278, 6.9333334
        %v327 = vsub.f32 %v279, 6.9333334
        %v328 = vsub.f32 %v280, 6.9333334
        %v329 = vsub.f32 %v281, 6.9333334
        %v330 = vsub.f32 %v282, 6.9333334
        %v331 = vsub.f32 %v283, 6.9333334
        %v332 = vsub.f32 %v276, 8.0
        %v333 = vsub.f32 %v277, 8.0
        %v334 = vsub.f32 %v278, 8.0
        %v335 = vsub.f32 %v279, 8.0
        %v336 = vsub.f32 %v280, 8.0
        %v337 = vsub.f32 %v281, 8.0
        %v338 = vsub.f32 %v282, 8.0
        %v339 = vsub.f32 %v283, 8.0
        %v340 = vsub.f32 %v276, 9.066667
        %v341 = vsub.f32 %v277, 9.066667
        %v342 = vsub.f32 %v278, 9.066667
        %v343 = vsub.f32 %v279, 9.066667
        %v344 = vsub.f32 %v280, 9.066667
        %v345 = vsub.f32 %v281, 9.066667
        %v346 = vsub.f32 %v282, 9.066667
        %v347 = vsub.f32 %v283, 9.066667
        %v348 = vsub.f32 %v276, 10.133333
        %v349 = vsub.f32 %v277, 10.133333
        %v350 = vsub.f32 %v278, 10.133333
        %v351 = vsub.f32 %v279, 10.133333
        %v352 = vsub.f32 %v280, 10.133333
        %v353 = vsub.f32 %v281, 10.133333
        %v354 = vsub.f32 %v282, 10.133333
        %v355 = vsub.f32 %v283, 10.133333
        %v356 = vsub.f32 %v276, 11.2
        %v357 = vsub.f32 %v277, 11.2
        %v358 = vsub.f32 %v278, 11.2
        %v359 = vsub.f32 %v279, 11.2
        %v360 = vsub.f32 %v280, 11.2
        %v361 = vsub.f32 %v281, 11.2
        %v362 = vsub.f32 %v282, 11.2
        %v363 = vsub.f32 %v283, 11.2
        %v364 = vsub.f32 %v276, 12.266666
        %v365 = vsub.f32 %v277, 12.266666
        %v366 = vsub.f32 %v278, 12.266666
        %v367 = vsub.f32 %v279, 12.266666
        %v368 = vsub.f32 %v280, 12.266666
        %v369 = vsub.f32 %v281, 12.266666
        %v370 = vsub.f32 %v282, 12.266666
        %v371 = vsub.f32 %v283, 12.266666
        %v372 = vsub.f32 %v276, 13.333333
        %v373 = vsub.f32 %v277, 13.333333
        %v374 = vsub.f32 %v278, 13.333333
        %v375 = vsub.f32 %v279, 13.333333
        %v376 = vsub.f32 %v280, 13.333333
        %v377 = vsub.f32 %v281, 13.333333
        %v378 = vsub.f32 %v282, 13.333333
        %v379 = vsub.f32 %v283, 13.333333
        %v380 = vsub.f32 %v276, 14.4
        %v381 = vsub.f32 %v277, 14.4
        %v382 = vsub.f32 %v278, 14.4
        %v383 = vsub.f32 %v279, 14.4
        %v384 = vsub.f32 %v280, 14.4
        %v385 = vsub.f32 %v281, 14.4
        %v386 = vsub.f32 %v282, 14.4
        %v387 = vsub.f32 %v283, 14.4
        %v388 = vsub.f32 %v276, 15.466667
        %v389 = vsub.f32 %v277, 15.466667
        %v390 = vsub.f32 %v278, 15.466667
        %v391 = vsub.f32 %v279, 15.466667
        %v392 = vsub.f32 %v280, 15.466667
        %v393 = vsub.f32 %v281, 15.466667
        %v394 = vsub.f32 %v282, 15.466667
        %v395 = vsub.f32 %v283, 15.466667
        %v396 = vsub.f32 %v276, 16.533333
        %v397 = vsub.f32 %v277, 16.533333
        %v398 = vsub.f32 %v278, 16.533333
        %v399 = vsub.f32 %v279, 16.533333
        %v400 = vsub.f32 %v280, 16.533333
        %v401 = vsub.f32 %v281, 16.533333
        %v402 = vsub.f32 %v282, 16.533333
        %v403 = vsub.f32 %v283, 16.533333
        %v404 = vsub.f32 %v276, 17.6
        %v405 = vsub.f32 %v277, 17.6
        %v406 = vsub.f32 %v278, 17.6
        %v407 = vsub.f32 %v279, 17.6
        %v408 = vsub.f32 %v280, 17.6
        %v409 = vsub.f32 %v281, 17.6
        %v410 = vsub.f32 %v282, 17.6
        %v411 = vsub.f32 %v283, 17.6
        %420 = vrot.lane.b32.xlu0 %v292, 25
        %v421 = vpop.permute.xlu0 %420
        %422 = vrot.lane.b32.xlu0 %v293, 25
        %v423 = vpop.permute.xlu0 %422
        %424 = vrot.lane.b32.xlu0 %v294, 25
        %v425 = vpop.permute.xlu0 %424
        %426 = vrot.lane.b32.xlu0 %v295, 25
        %v427 = vpop.permute.xlu0 %426
        %428 = vrot.lane.b32.xlu0 %v296, 25
        %v429 = vpop.permute.xlu0 %428
        %430 = vrot.lane.b32.xlu0 %v297, 25
        %v431 = vpop.permute.xlu0 %430
        %432 = vrot.lane.b32.xlu0 %v298, 25
        %v433 = vpop.permute.xlu0 %432
        %434 = vrot.lane.b32.xlu0 %v299, 25
        %v435 = vpop.permute.xlu0 %434
        %452 = vrot.lane.b32.xlu0 %v300, 50
        %v453 = vpop.permute.xlu0 %452
        %454 = vrot.lane.b32.xlu0 %v301, 50
        %v455 = vpop.permute.xlu0 %454
        %456 = vrot.lane.b32.xlu0 %v302, 50
        %v457 = vpop.permute.xlu0 %456
        %458 = vrot.lane.b32.xlu0 %v303, 50
        %v459 = vpop.permute.xlu0 %458
        %460 = vrot.lane.b32.xlu0 %v304, 50
        %v461 = vpop.permute.xlu0 %460
        %462 = vrot.lane.b32.xlu0 %v305, 50
        %v463 = vpop.permute.xlu0 %462
        %464 = vrot.lane.b32.xlu0 %v306, 50
        %v465 = vpop.permute.xlu0 %464
        %466 = vrot.lane.b32.xlu0 %v307, 50
        %v467 = vpop.permute.xlu0 %466
        %484 = vrot.lane.b32.xlu0 %v308, 75
        %v485 = vpop.permute.xlu0 %484
        %486 = vrot.lane.b32.xlu0 %v309, 75
        %v487 = vpop.permute.xlu0 %486
        %488 = vrot.lane.b32.xlu0 %v310, 75
        %v489 = vpop.permute.xlu0 %488
        %490 = vrot.lane.b32.xlu0 %v311, 75
        %v491 = vpop.permute.xlu0 %490
        %492 = vrot.lane.b32.xlu0 %v312, 75
        %v493 = vpop.permute.xlu0 %492
        %494 = vrot.lane.b32.xlu0 %v313, 75
        %v495 = vpop.permute.xlu0 %494
        %496 = vrot.lane.b32.xlu0 %v314, 75
        %v497 = vpop.permute.xlu0 %496
        %498 = vrot.lane.b32.xlu0 %v315, 75
        %v499 = vpop.permute.xlu0 %498
        %516 = vrot.lane.b32.xlu0 %v316, 100
        %v517 = vpop.permute.xlu0 %516
        %518 = vrot.lane.b32.xlu0 %v317, 100
        %v519 = vpop.permute.xlu0 %518
        %520 = vrot.lane.b32.xlu0 %v318, 100
        %v521 = vpop.permute.xlu0 %520
        %522 = vrot.lane.b32.xlu0 %v319, 100
        %v523 = vpop.permute.xlu0 %522
        %524 = vrot.lane.b32.xlu0 %v320, 100
        %v525 = vpop.permute.xlu0 %524
        %526 = vrot.lane.b32.xlu0 %v321, 100
        %v527 = vpop.permute.xlu0 %526
        %528 = vrot.lane.b32.xlu0 %v322, 100
        %v529 = vpop.permute.xlu0 %528
        %530 = vrot.lane.b32.xlu0 %v323, 100
        %v531 = vpop.permute.xlu0 %530
        %548 = vrot.lane.b32.xlu0 %v324, 125
        %v549 = vpop.permute.xlu0 %548
        %550 = vrot.lane.b32.xlu0 %v325, 125
        %v551 = vpop.permute.xlu0 %550
        %552 = vrot.lane.b32.xlu0 %v326, 125
        %v553 = vpop.permute.xlu0 %552
        %554 = vrot.lane.b32.xlu0 %v327, 125
        %v555 = vpop.permute.xlu0 %554
        %556 = vrot.lane.b32.xlu0 %v328, 125
        %v557 = vpop.permute.xlu0 %556
        %558 = vrot.lane.b32.xlu0 %v329, 125
        %v559 = vpop.permute.xlu0 %558
        %560 = vrot.lane.b32.xlu0 %v330, 125
        %v561 = vpop.permute.xlu0 %560
        %562 = vrot.lane.b32.xlu0 %v331, 125
        %v563 = vpop.permute.xlu0 %562
        %580 = vrot.lane.b32.xlu0 %v332, 22
        %v581 = vpop.permute.xlu0 %580
        %582 = vrot.lane.b32.xlu0 %v333, 22
        %v583 = vpop.permute.xlu0 %582
        %584 = vrot.lane.b32.xlu0 %v334, 22
        %v585 = vpop.permute.xlu0 %584
        %586 = vrot.lane.b32.xlu0 %v335, 22
        %v587 = vpop.permute.xlu0 %586
        %588 = vrot.lane.b32.xlu0 %v336, 22
        %v589 = vpop.permute.xlu0 %588
        %590 = vrot.lane.b32.xlu0 %v337, 22
        %v591 = vpop.permute.xlu0 %590
        %592 = vrot.lane.b32.xlu0 %v338, 22
        %v593 = vpop.permute.xlu0 %592
        %594 = vrot.lane.b32.xlu0 %v339, 22
        %v595 = vpop.permute.xlu0 %594
        %612 = vrot.lane.b32.xlu0 %v340, 47
        %v613 = vpop.permute.xlu0 %612
        %614 = vrot.lane.b32.xlu0 %v341, 47
        %v615 = vpop.permute.xlu0 %614
        %616 = vrot.lane.b32.xlu0 %v342, 47
        %v617 = vpop.permute.xlu0 %616
        %618 = vrot.lane.b32.xlu0 %v343, 47
        %v619 = vpop.permute.xlu0 %618
        %620 = vrot.lane.b32.xlu0 %v344, 47
        %v621 = vpop.permute.xlu0 %620
        %622 = vrot.lane.b32.xlu0 %v345, 47
        %v623 = vpop.permute.xlu0 %622
        %624 = vrot.lane.b32.xlu0 %v346, 47
        %v625 = vpop.permute.xlu0 %624
        %626 = vrot.lane.b32.xlu0 %v347, 47
        %v627 = vpop.permute.xlu0 %626
        %644 = vrot.lane.b32.xlu0 %v348, 72
        %v645 = vpop.permute.xlu0 %644
        %646 = vrot.lane.b32.xlu0 %v349, 72
        %v647 = vpop.permute.xlu0 %646
        %648 = vrot.lane.b32.xlu0 %v350, 72
        %v649 = vpop.permute.xlu0 %648
        %650 = vrot.lane.b32.xlu0 %v351, 72
        %v651 = vpop.permute.xlu0 %650
        %652 = vrot.lane.b32.xlu0 %v352, 72
        %v653 = vpop.permute.xlu0 %652
        %654 = vrot.lane.b32.xlu0 %v353, 72
        %v655 = vpop.permute.xlu0 %654
        %656 = vrot.lane.b32.xlu0 %v354, 72
        %v657 = vpop.permute.xlu0 %656
        %658 = vrot.lane.b32.xlu0 %v355, 72
        %v659 = vpop.permute.xlu0 %658
        %676 = vrot.lane.b32.xlu0 %v356, 97
        %v677 = vpop.permute.xlu0 %676
        %678 = vrot.lane.b32.xlu0 %v357, 97
        %v679 = vpop.permute.xlu0 %678
        %680 = vrot.lane.b32.xlu0 %v358, 97
        %v681 = vpop.permute.xlu0 %680
        %682 = vrot.lane.b32.xlu0 %v359, 97
        %v683 = vpop.permute.xlu0 %682
        %684 = vrot.lane.b32.xlu0 %v360, 97
        %v685 = vpop.permute.xlu0 %684
        %686 = vrot.lane.b32.xlu0 %v361, 97
        %v687 = vpop.permute.xlu0 %686
        %688 = vrot.lane.b32.xlu0 %v362, 97
        %v689 = vpop.permute.xlu0 %688
        %690 = vrot.lane.b32.xlu0 %v363, 97
        %v691 = vpop.permute.xlu0 %690
        %708 = vrot.lane.b32.xlu0 %v364, 122
        %v709 = vpop.permute.xlu0 %708
        %710 = vrot.lane.b32.xlu0 %v365, 122
        %v711 = vpop.permute.xlu0 %710
        %712 = vrot.lane.b32.xlu0 %v366, 122
        %v713 = vpop.permute.xlu0 %712
        %714 = vrot.lane.b32.xlu0 %v367, 122
        %v715 = vpop.permute.xlu0 %714
        %716 = vrot.lane.b32.xlu0 %v368, 122
        %v717 = vpop.permute.xlu0 %716
        %718 = vrot.lane.b32.xlu0 %v369, 122
        %v719 = vpop.permute.xlu0 %718
        %720 = vrot.lane.b32.xlu0 %v370, 122
        %v721 = vpop.permute.xlu0 %720
        %722 = vrot.lane.b32.xlu0 %v371, 122
        %v723 = vpop.permute.xlu0 %722
        %740 = vrot.lane.b32.xlu0 %v372, 19
        %v741 = vpop.permute.xlu0 %740
        %742 = vrot.lane.b32.xlu0 %v373, 19
        %v743 = vpop.permute.xlu0 %742
        %744 = vrot.lane.b32.xlu0 %v374, 19
        %v745 = vpop.permute.xlu0 %744
        %746 = vrot.lane.b32.xlu0 %v375, 19
        %v747 = vpop.permute.xlu0 %746
        %748 = vrot.lane.b32.xlu0 %v376, 19
        %v749 = vpop.permute.xlu0 %748
        %750 = vrot.lane.b32.xlu0 %v377, 19
        %v751 = vpop.permute.xlu0 %750
        %752 = vrot.lane.b32.xlu0 %v378, 19
        %v753 = vpop.permute.xlu0 %752
        %754 = vrot.lane.b32.xlu0 %v379, 19
        %v755 = vpop.permute.xlu0 %754
        %772 = vrot.lane.b32.xlu0 %v380, 44
        %v773 = vpop.permute.xlu0 %772
        %774 = vrot.lane.b32.xlu0 %v381, 44
        %v775 = vpop.permute.xlu0 %774
        %776 = vrot.lane.b32.xlu0 %v382, 44
        %v777 = vpop.permute.xlu0 %776
        %778 = vrot.lane.b32.xlu0 %v383, 44
        %v779 = vpop.permute.xlu0 %778
        %780 = vrot.lane.b32.xlu0 %v384, 44
        %v781 = vpop.permute.xlu0 %780
        %782 = vrot.lane.b32.xlu0 %v385, 44
        %v783 = vpop.permute.xlu0 %782
        %784 = vrot.lane.b32.xlu0 %v386, 44
        %v785 = vpop.permute.xlu0 %784
        %786 = vrot.lane.b32.xlu0 %v387, 44
        %v787 = vpop.permute.xlu0 %786
        %804 = vrot.lane.b32.xlu0 %v388, 69
        %v805 = vpop.permute.xlu0 %804
        %806 = vrot.lane.b32.xlu0 %v389, 69
        %v807 = vpop.permute.xlu0 %806
        %808 = vrot.lane.b32.xlu0 %v390, 69
        %v809 = vpop.permute.xlu0 %808
        %810 = vrot.lane.b32.xlu0 %v391, 69
        %v811 = vpop.permute.xlu0 %810
        %812 = vrot.lane.b32.xlu0 %v392, 69
        %v813 = vpop.permute.xlu0 %812
        %814 = vrot.lane.b32.xlu0 %v393, 69
        %v815 = vpop.permute.xlu0 %814
        %816 = vrot.lane.b32.xlu0 %v394, 69
        %v817 = vpop.permute.xlu0 %816
        %818 = vrot.lane.b32.xlu0 %v395, 69
        %v819 = vpop.permute.xlu0 %818
        %836 = vrot.lane.b32.xlu0 %v396, 94
        %v837 = vpop.permute.xlu0 %836
        %838 = vrot.lane.b32.xlu0 %v397, 94
        %v839 = vpop.permute.xlu0 %838
        %840 = vrot.lane.b32.xlu0 %v398, 94
        %v841 = vpop.permute.xlu0 %840
        %842 = vrot.lane.b32.xlu0 %v399, 94
        %v843 = vpop.permute.xlu0 %842
        %844 = vrot.lane.b32.xlu0 %v400, 94
        %v845 = vpop.permute.xlu0 %844
        %846 = vrot.lane.b32.xlu0 %v401, 94
        %v847 = vpop.permute.xlu0 %846
        %848 = vrot.lane.b32.xlu0 %v402, 94
        %v849 = vpop.permute.xlu0 %848
        %850 = vrot.lane.b32.xlu0 %v403, 94
        %v851 = vpop.permute.xlu0 %850
        %868 = vrot.lane.b32.xlu0 %v404, 119
        %v869 = vpop.permute.xlu0 %868
        %870 = vrot.lane.b32.xlu0 %v405, 119
        %v871 = vpop.permute.xlu0 %870
        %872 = vrot.lane.b32.xlu0 %v406, 119
        %v873 = vpop.permute.xlu0 %872
        %874 = vrot.lane.b32.xlu0 %v407, 119
        %v875 = vpop.permute.xlu0 %874
        %876 = vrot.lane.b32.xlu0 %v408, 119
        %v877 = vpop.permute.xlu0 %876
        %878 = vrot.lane.b32.xlu0 %v409, 119
        %v879 = vpop.permute.xlu0 %878
        %880 = vrot.lane.b32.xlu0 %v410, 119
        %v881 = vpop.permute.xlu0 %880
        %882 = vrot.lane.b32.xlu0 %v411, 119
        %v883 = vpop.permute.xlu0 %882
        %vm892 = vcmask 203776
        %v893 = vsel %vm892, %v284, %v421
        %v894 = vsel %vm892, %v285, %v423
        %v895 = vsel %vm892, %v286, %v425
        %v896 = vsel %vm892, %v287, %v427
        %v897 = vsel %vm892, %v288, %v429
        %v898 = vsel %vm892, %v289, %v431
        %v899 = vsel %vm892, %v290, %v433
        %v900 = vsel %vm892, %v291, %v435
        %vm901 = vcmask 408576
        %v902 = vsel %vm901, %v893, %v453
        %v903 = vsel %vm901, %v894, %v455
        %v904 = vsel %vm901, %v895, %v457
        %v905 = vsel %vm901, %v896, %v459
        %v906 = vsel %vm901, %v897, %v461
        %v907 = vsel %vm901, %v898, %v463
        %v908 = vsel %vm901, %v899, %v465
        %v909 = vsel %vm901, %v900, %v467
        %vm910 = vcmask 613376
        %v911 = vsel %vm910, %v902, %v485
        %v912 = vsel %vm910, %v903, %v487
        %v913 = vsel %vm910, %v904, %v489
        %v914 = vsel %vm910, %v905, %v491
        %v915 = vsel %vm910, %v906, %v493
        %v916 = vsel %vm910, %v907, %v495
        %v917 = vsel %vm910, %v908, %v497
        %v918 = vsel %vm910, %v909, %v499
        %vm919 = vcmask 818176
        %v920 = vsel %vm919, %v911, %v517
        %v921 = vsel %vm919, %v912, %v519
        %v922 = vsel %vm919, %v913, %v521
        %v923 = vsel %vm919, %v914, %v523
        %v924 = vsel %vm919, %v915, %v525
        %v925 = vsel %vm919, %v916, %v527
        %v926 = vsel %vm919, %v917, %v529
        %v927 = vsel %vm919, %v918, %v531
        %vm928 = vcmask 1022976
        %v929 = vsel %vm928, %v920, %v549
        %v930 = vsel %vm928, %v921, %v551
        %v931 = vsel %vm928, %v922, %v553
        %v932 = vsel %vm928, %v923, %v555
        %v933 = vsel %vm928, %v924, %v557
        %v934 = vsel %vm928, %v925, %v559
        %v935 = vsel %vm928, %v926, %v561
        %v936 = vsel %vm928, %v927, %v563
        %vm937 = vcmask 179200
        %v938 = vsel %vm937, %v549, %v581
        %v939 = vsel %vm937, %v551, %v583
        %v940 = vsel %vm937, %v553, %v585
        %v941 = vsel %vm937, %v555, %v587
        %v942 = vsel %vm937, %v557, %v589
        %v943 = vsel %vm937, %v559, %v591
        %v944 = vsel %vm937, %v561, %v593
        %v945 = vsel %vm937, %v563, %v595
        %vm946 = vcmask 384000
        %v947 = vsel %vm946, %v938, %v613
        %v948 = vsel %vm946, %v939, %v615
        %v949 = vsel %vm946, %v940, %v617
        %v950 = vsel %vm946, %v941, %v619
        %v951 = vsel %vm946, %v942, %v621
        %v952 = vsel %vm946, %v943, %v623
        %v953 = vsel %vm946, %v944, %v625
        %v954 = vsel %vm946, %v945, %v627
        %vm955 = vcmask 588800
        %v956 = vsel %vm955, %v947, %v645
        %v957 = vsel %vm955, %v948, %v647
        %v958 = vsel %vm955, %v949, %v649
        %v959 = vsel %vm955, %v950, %v651
        %v960 = vsel %vm955, %v951, %v653
        %v961 = vsel %vm955, %v952, %v655
        %v962 = vsel %vm955, %v953, %v657
        %v963 = vsel %vm955, %v954, %v659
        %vm964 = vcmask 793600
        %v965 = vsel %vm964, %v956, %v677
        %v966 = vsel %vm964, %v957, %v679
        %v967 = vsel %vm964, %v958, %v681
        %v968 = vsel %vm964, %v959, %v683
        %v969 = vsel %vm964, %v960, %v685
        %v970 = vsel %vm964, %v961, %v687
        %v971 = vsel %vm964, %v962, %v689
        %v972 = vsel %vm964, %v963, %v691
        %vm973 = vcmask 998400
        %v974 = vsel %vm973, %v965, %v709
        %v975 = vsel %vm973, %v966, %v711
        %v976 = vsel %vm973, %v967, %v713
        %v977 = vsel %vm973, %v968, %v715
        %v978 = vsel %vm973, %v969, %v717
        %v979 = vsel %vm973, %v970, %v719
        %v980 = vsel %vm973, %v971, %v721
        %v981 = vsel %vm973, %v972, %v723
        %vm982 = vcmask 154624
        %v983 = vsel %vm982, %v709, %v741
        %v984 = vsel %vm982, %v711, %v743
        %v985 = vsel %vm982, %v713, %v745
        %v986 = vsel %vm982, %v715, %v747
        %v987 = vsel %vm982, %v717, %v749
        %v988 = vsel %vm982, %v719, %v751
        %v989 = vsel %vm982, %v721, %v753
        %v990 = vsel %vm982, %v723, %v755
        %vm991 = vcmask 359424
        %v992 = vsel %vm991, %v983, %v773
        %v993 = vsel %vm991, %v984, %v775
        %v994 = vsel %vm991, %v985, %v777
        %v995 = vsel %vm991, %v986, %v779
        %v996 = vsel %vm991, %v987, %v781
        %v997 = vsel %vm991, %v988, %v783
        %v998 = vsel %vm991, %v989, %v785
        %v999 = vsel %vm991, %v990, %v787
        %vm1000 = vcmask 564224
        %v1001 = vsel %vm1000, %v992, %v805
        %v1002 = vsel %vm1000, %v993, %v807
        %v1003 = vsel %vm1000, %v994, %v809
        %v1004 = vsel %vm1000, %v995, %v811
        %v1005 = vsel %vm1000, %v996, %v813
        %v1006 = vsel %vm1000, %v997, %v815
        %v1007 = vsel %vm1000, %v998, %v817
        %v1008 = vsel %vm1000, %v999, %v819
        %vm1009 = vcmask 769024
        %v1010 = vsel %vm1009, %v1001, %v837
        %v1011 = vsel %vm1009, %v1002, %v839
        %v1012 = vsel %vm1009, %v1003, %v841
        %v1013 = vsel %vm1009, %v1004, %v843
        %v1014 = vsel %vm1009, %v1005, %v845
        %v1015 = vsel %vm1009, %v1006, %v847
        %v1016 = vsel %vm1009, %v1007, %v849
        %v1017 = vsel %vm1009, %v1008, %v851
        %vm1018 = vcmask 973824
        %v1019 = vsel %vm1018, %v1010, %v869
        %v1020 = vsel %vm1018, %v1011, %v871
        %v1021 = vsel %vm1018, %v1012, %v873
        %v1022 = vsel %vm1018, %v1013, %v875
        %v1023 = vsel %vm1018, %v1014, %v877
        %v1024 = vsel %vm1018, %v1015, %v879
        %v1025 = vsel %vm1018, %v1016, %v881
        %v1026 = vsel %vm1018, %v1017, %v883
        %v1027 = vmul.f32 %v929, %v929
        %v1028 = vmul.f32 %v974, %v974
        %v1029 = vmul.f32 %v1019, %v1019
        %v1030 = vmul.f32 %v869, %v869
        %v1031 = vmul.f32 %v930, %v930
        %v1032 = vmul.f32 %v975, %v975
        %v1033 = vmul.f32 %v1020, %v1020
        %v1034 = vmul.f32 %v871, %v871
        %v1035 = vmul.f32 %v931, %v931
        %v1036 = vmul.f32 %v976, %v976
        %v1037 = vmul.f32 %v1021, %v1021
        %v1038 = vmul.f32 %v873, %v873
        %v1039 = vmul.f32 %v932, %v932
        %v1040 = vmul.f32 %v977, %v977
        %v1041 = vmul.f32 %v1022, %v1022
        %v1042 = vmul.f32 %v875, %v875
        %v1043 = vmul.f32 %v933, %v933
        %v1044 = vmul.f32 %v978, %v978
        %v1045 = vmul.f32 %v1023, %v1023
        %v1046 = vmul.f32 %v877, %v877
        %v1047 = vmul.f32 %v934, %v934
        %v1048 = vmul.f32 %v979, %v979
        %v1049 = vmul.f32 %v1024, %v1024
        %v1050 = vmul.f32 %v879, %v879
        %v1051 = vmul.f32 %v935, %v935
        %v1052 = vmul.f32 %v980, %v980
        %v1053 = vmul.f32 %v1025, %v1025
        %v1054 = vmul.f32 %v881, %v881
        %v1055 = vmul.f32 %v936, %v936
        %v1056 = vmul.f32 %v981, %v981
        %v1057 = vmul.f32 %v1026, %v1026
        %v1058 = vmul.f32 %v883, %v883
        %v1059 = vsub.f32 0.0, %v1027
        %v1060 = vsub.f32 0.0, %v1028
        %v1061 = vsub.f32 0.0, %v1029
        %v1062 = vsub.f32 0.0, %v1030
        %v1063 = vsub.f32 0.0, %v1031
        %v1064 = vsub.f32 0.0, %v1032
        %v1065 = vsub.f32 0.0, %v1033
        %v1066 = vsub.f32 0.0, %v1034
        %v1067 = vsub.f32 0.0, %v1035
        %v1068 = vsub.f32 0.0, %v1036
        %v1069 = vsub.f32 0.0, %v1037
        %v1070 = vsub.f32 0.0, %v1038
        %v1071 = vsub.f32 0.0, %v1039
        %v1072 = vsub.f32 0.0, %v1040
        %v1073 = vsub.f32 0.0, %v1041
        %v1074 = vsub.f32 0.0, %v1042
        %v1075 = vsub.f32 0.0, %v1043
        %v1076 = vsub.f32 0.0, %v1044
        %v1077 = vsub.f32 0.0, %v1045
        %v1078 = vsub.f32 0.0, %v1046
        %v1079 = vsub.f32 0.0, %v1047
        %v1080 = vsub.f32 0.0, %v1048
        %v1081 = vsub.f32 0.0, %v1049
        %v1082 = vsub.f32 0.0, %v1050
        %v1083 = vsub.f32 0.0, %v1051
        %v1084 = vsub.f32 0.0, %v1052
        %v1085 = vsub.f32 0.0, %v1053
        %v1086 = vsub.f32 0.0, %v1054
        %v1087 = vsub.f32 0.0, %v1055
        %v1088 = vsub.f32 0.0, %v1056
        %v1089 = vsub.f32 0.0, %v1057
        %v1090 = vsub.f32 0.0, %v1058
        %v1091 = vmul.f32 %v1059, 1.442695
        %v1092 = vpow.pop %v1091
        %v1093 = vmul.f32 %v1060, 1.442695
        %v1094 = vpow.pop %v1093
        %v1095 = vmul.f32 %v1061, 1.442695
        %v1096 = vpow.pop %v1095
        %v1097 = vmul.f32 %v1062, 1.442695
        %v1098 = vpow.pop %v1097
        %v1099 = vmul.f32 %v1063, 1.442695
        %v1100 = vpow.pop %v1099
        %v1101 = vmul.f32 %v1064, 1.442695
        %v1102 = vpow.pop %v1101
        %v1103 = vmul.f32 %v1065, 1.442695
        %v1104 = vpow.pop %v1103
        %v1105 = vmul.f32 %v1066, 1.442695
        %v1106 = vpow.pop %v1105
        %v1107 = vmul.f32 %v1067, 1.442695
        %v1108 = vpow.pop %v1107
        %v1109 = vmul.f32 %v1068, 1.442695
        %v1110 = vpow.pop %v1109
        %v1111 = vmul.f32 %v1069, 1.442695
        %v1112 = vpow.pop %v1111
        %v1113 = vmul.f32 %v1070, 1.442695
        %v1114 = vpow.pop %v1113
        %v1115 = vmul.f32 %v1071, 1.442695
        %v1116 = vpow.pop %v1115
        %v1117 = vmul.f32 %v1072, 1.442695
        %v1118 = vpow.pop %v1117
        %v1119 = vmul.f32 %v1073, 1.442695
        %v1120 = vpow.pop %v1119
        %v1121 = vmul.f32 %v1074, 1.442695
        %v1122 = vpow.pop %v1121
        %v1123 = vmul.f32 %v1075, 1.442695
        %v1124 = vpow.pop %v1123
        %v1125 = vmul.f32 %v1076, 1.442695
        %v1126 = vpow.pop %v1125
        %v1127 = vmul.f32 %v1077, 1.442695
        %v1128 = vpow.pop %v1127
        %v1129 = vmul.f32 %v1078, 1.442695
        %v1130 = vpow.pop %v1129
        %v1131 = vmul.f32 %v1079, 1.442695
        %v1132 = vpow.pop %v1131
        %v1133 = vmul.f32 %v1080, 1.442695
        %v1134 = vpow.pop %v1133
        %v1135 = vmul.f32 %v1081, 1.442695
        %v1136 = vpow.pop %v1135
        %v1137 = vmul.f32 %v1082, 1.442695
        %v1138 = vpow.pop %v1137
        %v1139 = vmul.f32 %v1083, 1.442695
        %v1140 = vpow.pop %v1139
        %v1141 = vmul.f32 %v1084, 1.442695
        %v1142 = vpow.pop %v1141
        %v1143 = vmul.f32 %v1085, 1.442695
        %v1144 = vpow.pop %v1143
        %v1145 = vmul.f32 %v1086, 1.442695
        %v1146 = vpow.pop %v1145
        %v1147 = vmul.f32 %v1087, 1.442695
        %v1148 = vpow.pop %v1147
        %v1149 = vmul.f32 %v1088, 1.442695
        %v1150 = vpow.pop %v1149
        %v1151 = vmul.f32 %v1089, 1.442695
        %v1152 = vpow.pop %v1151
        %v1153 = vmul.f32 %v1090, 1.442695
        %v1154 = vpow.pop %v1153
        %v1155 = vcvt.f32.s32.to.zero.pseudo %v268
        %v1156 = vcvt.f32.s32.to.zero.pseudo %v269
        %v1157 = vcvt.f32.s32.to.zero.pseudo %v270
        %v1158 = vcvt.f32.s32.to.zero.pseudo %v271
        %v1159 = vcvt.f32.s32.to.zero.pseudo %v272
        %v1160 = vcvt.f32.s32.to.zero.pseudo %v273
        %v1161 = vcvt.f32.s32.to.zero.pseudo %v274
        %v1162 = vcvt.f32.s32.to.zero.pseudo %v275
        %v1163 = vlaneseq
        %v1164 = vand.u32 %v1163, 127
        %1165 = vset.pattern.permute.xlu0 25
        %1166 = vperm.xlu0 %1165, %v1155
        %v1167 = vpop.permute.xlu0 %1166
        %1168 = vset.pattern.permute.xlu0 25
        %1169 = vperm.xlu0 %1168, %v1156
        %v1170 = vpop.permute.xlu0 %1169
        %1171 = vset.pattern.permute.xlu0 25
        %1172 = vperm.xlu0 %1171, %v1157
        %v1173 = vpop.permute.xlu0 %1172
        %1174 = vset.pattern.permute.xlu0 25
        %1175 = vperm.xlu0 %1174, %v1158
        %v1176 = vpop.permute.xlu0 %1175
        %1177 = vset.pattern.permute.xlu0 25
        %1178 = vperm.xlu0 %1177, %v1159
        %v1179 = vpop.permute.xlu0 %1178
        %1180 = vset.pattern.permute.xlu0 25
        %1181 = vperm.xlu0 %1180, %v1160
        %v1182 = vpop.permute.xlu0 %1181
        %1183 = vset.pattern.permute.xlu0 25
        %1184 = vperm.xlu0 %1183, %v1161
        %v1185 = vpop.permute.xlu0 %1184
        %1186 = vset.pattern.permute.xlu0 25
        %1187 = vperm.xlu0 %1186, %v1162
        %v1188 = vpop.permute.xlu0 %1187
        %vm1189 = vcmp.eq.s32.totalorder %v1167, %v1164
        %vm1190 = vcmp.eq.s32.totalorder %v1170, %v1164
        %vm1191 = vcmp.eq.s32.totalorder %v1173, %v1164
        %vm1192 = vcmp.eq.s32.totalorder %v1176, %v1164
        %vm1193 = vcmp.eq.s32.totalorder %v1179, %v1164
        %vm1194 = vcmp.eq.s32.totalorder %v1182, %v1164
        %vm1195 = vcmp.eq.s32.totalorder %v1185, %v1164
        %vm1196 = vcmp.eq.s32.totalorder %v1188, %v1164
        %v1197 = vsel %vm1189, 1, 0
        %v1198 = vsel %vm1190, 1, 0
        %v1199 = vsel %vm1191, 1, 0
        %v1200 = vsel %vm1192, 1, 0
        %v1201 = vsel %vm1193, 1, 0
        %v1202 = vsel %vm1194, 1, 0
        %v1203 = vsel %vm1195, 1, 0
        %v1204 = vsel %vm1196, 1, 0
        %v1205 = vcvt.s32.f32 %v1197
        %v1206 = vcvt.s32.f32 %v1198
        %v1207 = vcvt.s32.f32 %v1199
        %v1208 = vcvt.s32.f32 %v1200
        %v1209 = vcvt.s32.f32 %v1201
        %v1210 = vcvt.s32.f32 %v1202
        %v1211 = vcvt.s32.f32 %v1203
        %v1212 = vcvt.s32.f32 %v1204
        %v1213 = vld [vmem:[%s1] sm:$0xff]
        %v1214 = vld [vmem:[%s1 + $0x8] sm:$0xff]
        %v1215 = vld [vmem:[%s1 + $0x10] sm:$0xff]
        %v1216 = vld [vmem:[%s1 + $0x18] sm:$0xff]
        %v1217 = vld [vmem:[%s1 + $0x20] sm:$0xff]
        %v1218 = vld [vmem:[%s1 + $0x28] sm:$0xff]
        %v1219 = vld [vmem:[%s1 + $0x30] sm:$0xff]
        %v1220 = vld [vmem:[%s1 + $0x38] sm:$0xff]
        %v1221 = vld [vmem:[%s1 + $0x40] sm:$0x3]
        %v1222 = vld [vmem:[#allocation2] sm:$0xff]
        %v1223 = vld [vmem:[#allocation2 + $0x8] sm:$0xff]
        %v1224 = vld [vmem:[#allocation2 + $0x10] sm:$0xff]
        %v1225 = vld [vmem:[#allocation2 + $0x18] sm:$0xff]
        %v1226 = vld [vmem:[#allocation2 + $0x20] sm:$0xff]
        %v1227 = vld [vmem:[#allocation2 + $0x28] sm:$0xff]
        %v1228 = vld [vmem:[#allocation2 + $0x30] sm:$0xff]
        %v1229 = vld [vmem:[#allocation2 + $0x38] sm:$0xff]
        %v1230 = vld [vmem:[#allocation2 + $0x40] sm:$0xff]
        %v1231 = vld [vmem:[#allocation2 + $0x48] sm:$0xff]
        %v1232 = vld [vmem:[#allocation2 + $0x50] sm:$0xff]
        %v1233 = vld [vmem:[#allocation2 + $0x58] sm:$0xff]
        %v1234 = vld [vmem:[#allocation2 + $0x60] sm:$0xff]
        %v1235 = vld [vmem:[#allocation2 + $0x68] sm:$0xff]
        %v1236 = vld [vmem:[#allocation2 + $0x70] sm:$0xff]
        %v1237 = vld [vmem:[#allocation2 + $0x78] sm:$0xff]
        %v1238 = vld [vmem:[#allocation2 + $0x80] sm:$0xff]
        %v1239 = vld [vmem:[#allocation2 + $0x88] sm:$0xff]
        %v1240 = vld [vmem:[#allocation2 + $0x90] sm:$0xff]
        %v1241 = vld [vmem:[#allocation2 + $0x98] sm:$0xff]
        %v1242 = vld [vmem:[#allocation2 + $0xa0] sm:$0xff]
        %v1243 = vld [vmem:[#allocation2 + $0xa8] sm:$0xff]
        %v1244 = vld [vmem:[#allocation2 + $0xb0] sm:$0xff]
        %v1245 = vld [vmem:[#allocation2 + $0xb8] sm:$0xff]
        %v1246 = vld [vmem:[#allocation2 + $0xc0] sm:$0xff]
        %v1247 = vld [vmem:[#allocation2 + $0xc8] sm:$0xff]
        %v1248 = vld [vmem:[#allocation2 + $0xd0] sm:$0xff]
        %v1249 = vld [vmem:[#allocation2 + $0xd8] sm:$0xff]
        %v1250 = vld [vmem:[#allocation2 + $0xe0] sm:$0xff]
        %v1251 = vld [vmem:[#allocation2 + $0xe8] sm:$0xff]
        %v1252 = vld [vmem:[#allocation2 + $0xf0] sm:$0xff]
        %v1253 = vld [vmem:[#allocation2 + $0xf8] sm:$0xff]
        %v1254 = vld [vmem:[#allocation2 + $0x100] sm:$0xff]
        %v1255 = vld [vmem:[#allocation2 + $0x108] sm:$0xff]
        %v1256 = vld [vmem:[#allocation2 + $0x110] sm:$0xff]
        %v1257 = vld [vmem:[#allocation2 + $0x118] sm:$0xff]
        %v1258 = vld [vmem:[#allocation2 + $0x120] sm:$0xff]
        %v1259 = vld [vmem:[#allocation2 + $0x128] sm:$0xff]
        %v1260 = vld [vmem:[#allocation2 + $0x130] sm:$0xff]
        %v1261 = vld [vmem:[#allocation2 + $0x138] sm:$0xff]
        %v1262 = vld [vmem:[#allocation2 + $0x140] sm:$0xff]
        %v1263 = vld [vmem:[#allocation2 + $0x148] sm:$0xff]
        %v1264 = vld [vmem:[#allocation2 + $0x150] sm:$0xff]
        %v1265 = vld [vmem:[#allocation2 + $0x158] sm:$0xff]
        %v1266 = vld [vmem:[#allocation2 + $0x160] sm:$0xff]
        %v1267 = vld [vmem:[#allocation2 + $0x168] sm:$0xff]
        %v1268 = vld [vmem:[#allocation2 + $0x170] sm:$0xff]
        %v1269 = vld [vmem:[#allocation2 + $0x178] sm:$0xff]
        %v1270 = vld [vmem:[#allocation2 + $0x180] sm:$0xff]
        %v1271 = vld [vmem:[#allocation2 + $0x188] sm:$0xff]
        %vm1272 = vcmask 130048
        %v1274 = vsel %vm1272, %v1098, 0
        %v1277 = vsel %vm1272, %v1106, 0
        %v1280 = vsel %vm1272, %v1114, 0
        %v1283 = vsel %vm1272, %v1122, 0
        %v1286 = vsel %vm1272, %v1130, 0
        %v1289 = vsel %vm1272, %v1138, 0
        %v1292 = vsel %vm1272, %v1146, 0
        %v1295 = vsel %vm1272, %v1154, 0
        %1297 = vmatprep.subr.mxu0 0.0
        %1298 = vmatpush1.msra.mxu0 %v1222
        %1299 = vmatprep.subr.mxu0 0.0
        %1300 = vmatpush1.msra.mxu0 %v1223
        %1301 = vmatprep.subr.mxu0 0.0
        %1302 = vmatpush1.msra.mxu0 %v1224
        %1303 = vmatprep.subr.mxu0 0.0
        %1304 = vmatpush1.msra.mxu0 %v1225
        %1305 = vmatprep.subr.mxu0 0.0
        %1306 = vmatpush1.msra.mxu0 %v1226
        %1307 = vmatprep.subr.mxu0 0.0
        %1308 = vmatpush1.msra.mxu0 %v1227
        %1309 = vmatprep.subr.mxu0 0.0
        %1310 = vmatpush1.msra.mxu0 %v1228
        %1311 = vmatprep.subr.mxu0 0.0
        %1312 = vmatpush1.msra.mxu0 %v1229
        %1313 = vmatprep.subr.mxu0 0.0
        %1314 = vmatpush1.msra.mxu0 %v1230
        %1315 = vmatprep.subr.mxu0 0.0
        %1316 = vmatpush1.msra.mxu0 %v1231
        %1317 = vmatprep.subr.mxu0 0.0
        %1318 = vmatpush1.msra.mxu0 %v1232
        %1319 = vmatprep.subr.mxu0 0.0
        %1320 = vmatpush1.msra.mxu0 %v1233
        %1321 = vmatprep.subr.mxu0 0.0
        %1322 = vmatpush1.msra.mxu0 %v1234
        %1323 = vmatprep.subr.mxu0 0.0
        %1324 = vmatpush1.msra.mxu0 %v1235
        %1325 = vmatprep.subr.mxu0 0.0
        %1326 = vmatpush1.msra.mxu0 %v1236
        %1327 = vmatprep.subr.mxu0 0.0
        %1328 = vmatpush1.msra.mxu0 %v1237
        %1329 = vmatprep.subr.mxu0 0.0
        %1330 = vmatpush1.msra.mxu0 %v1238
        %1331 = vmatprep.subr.mxu0 0.0
        %1332 = vmatpush1.msra.mxu0 %v1239
        %1333 = vmatprep.subr.mxu0 0.0
        %1334 = vmatpush1.msra.mxu0 %v1240
        %1335 = vmatprep.subr.mxu0 0.0
        %1336 = vmatpush1.msra.mxu0 %v1241
        %1337 = vmatprep.subr.mxu0 0.0
        %1338 = vmatpush1.msra.mxu0 %v1242
        %1339 = vmatprep.subr.mxu0 0.0
        %1340 = vmatpush1.msra.mxu0 %v1243
        %1341 = vmatprep.subr.mxu0 0.0
        %1342 = vmatpush1.msra.mxu0 %v1244
        %1343 = vmatprep.subr.mxu0 0.0
        %1344 = vmatpush1.msra.mxu0 %v1245
        %1345 = vmatprep.subr.mxu0 0.0
        %1346 = vmatpush1.msra.mxu0 %v1246
        %1347 = vmatprep.subr.mxu0 0.0
        %1348 = vmatpush1.msra.mxu0 %v1247
        %1349 = vmatprep.subr.mxu0 0.0
        %1350 = vmatpush1.msra.mxu0 %v1248
        %1351 = vmatprep.subr.mxu0 0.0
        %1352 = vmatpush1.msra.mxu0 %v1249
        %1353 = vmatprep.subr.mxu0 0.0
        %1354 = vmatpush1.msra.mxu0 %v1250
        %1355 = vmatprep.subr.mxu0 0.0
        %1356 = vmatpush1.msra.mxu0 %v1251
        %1357 = vmatprep.subr.mxu0 0.0
        %1358 = vmatpush1.msra.mxu0 %v1252
        %1359 = vmatprep.subr.mxu0 0.0
        %1360 = vmatpush1.msra.mxu0 %v1253
        %1361 = vmatprep.mubr.f32.mxu0 %v1094
        %1362 = vmatmul.mubr.f32.gmra.mrb[0].mxu0 %v1092
        %v1363 = vpop.f32.mrb[0].mxu0
        %v1364 = vadd.f32 0.0, %v1363
        %v1365 = vpop.f32.mrb[0].mxu0
        %1366 = vmatprep.mubr.f32.mxu0 %v1102
        %1367 = vmatmul.mubr.f32.gmra.mrb[0].mxu0 %v1100
        %v1368 = vpop.f32.mrb[0].mxu0
        %v1369 = vadd.f32 0.0, %v1368
        %v1370 = vpop.f32.mrb[0].mxu0
        %1371 = vmatprep.mubr.f32.mxu0 %v1110
        %1372 = vmatmul.mubr.f32.gmra.mrb[0].mxu0 %v1108
        %v1373 = vpop.f32.mrb[0].mxu0
        %v1374 = vadd.f32 0.0, %v1373
        %v1375 = vpop.f32.mrb[0].mxu0
        %1376 = vmatprep.mubr.f32.mxu0 %v1118
        %1377 = vmatmul.mubr.f32.gmra.mrb[0].mxu0 %v1116
        %v1378 = vpop.f32.mrb[0].mxu0
        %v1379 = vadd.f32 0.0, %v1378
        %v1380 = vpop.f32.mrb[0].mxu0
        %1381 = vmatprep.mubr.f32.mxu0 %v1126
        %1382 = vmatmul.mubr.f32.gmra.mrb[0].mxu0 %v1124
        %v1383 = vpop.f32.mrb[0].mxu0
        %v1384 = vadd.f32 0.0, %v1383
        %v1385 = vpop.f32.mrb[0].mxu0
        %1386 = vmatprep.mubr.f32.mxu0 %v1134
        %1387 = vmatmul.mubr.f32.gmra.mrb[0].mxu0 %v1132
        %v1388 = vpop.f32.mrb[0].mxu0
        %v1389 = vadd.f32 0.0, %v1388
        %v1390 = vpop.f32.mrb[0].mxu0
        %1391 = vmatprep.mubr.f32.mxu0 %v1142
        %1392 = vmatmul.mubr.f32.gmra.mrb[0].mxu0 %v1140
        %v1393 = vpop.f32.mrb[0].mxu0
        %v1394 = vadd.f32 0.0, %v1393
        %v1395 = vpop.f32.mrb[0].mxu0
        %1396 = vmatprep.mubr.f32.mxu0 %v1150
        %1397 = vmatmul.mubr.f32.gmra.mrb[0].mxu0 %v1148
        %v1398 = vpop.f32.mrb[0].mxu0
        %v1399 = vadd.f32 0.0, %v1398
        %v1400 = vpop.f32.mrb[0].mxu0
        %1401 = vdwg.mxu0
        %1402 = vmatprep.subr.mxu0 0.0
        %1403 = vmatpush1.msra.mxu0 %v1254
        %1404 = vmatprep.subr.mxu0 0.0
        %1405 = vmatpush1.msra.mxu0 %v1255
        %1406 = vmatprep.subr.mxu0 0.0
        %1407 = vmatpush1.msra.mxu0 %v1256
        %1408 = vmatprep.subr.mxu0 0.0
        %1409 = vmatpush1.msra.mxu0 %v1257
        %1410 = vmatprep.subr.mxu0 0.0
        %1411 = vmatpush1.msra.mxu0 %v1258
        %1412 = vmatprep.subr.mxu0 0.0
        %1413 = vmatpush1.msra.mxu0 %v1259
        %1414 = vmatprep.subr.mxu0 0.0
        %1415 = vmatpush1.msra.mxu0 %v1260
        %1416 = vmatprep.subr.mxu0 0.0
        %1417 = vmatpush1.msra.mxu0 %v1261
        %1418 = vmatprep.subr.mxu0 0.0
        %1419 = vmatpush1.msra.mxu0 %v1262
        %1420 = vmatprep.subr.mxu0 0.0
        %1421 = vmatpush1.msra.mxu0 %v1263
        %1422 = vmatprep.subr.mxu0 0.0
        %1423 = vmatpush1.msra.mxu0 %v1264
        %1424 = vmatprep.subr.mxu0 0.0
        %1425 = vmatpush1.msra.mxu0 %v1265
        %1426 = vmatprep.subr.mxu0 0.0
        %1427 = vmatpush1.msra.mxu0 %v1266
        %1428 = vmatprep.subr.mxu0 0.0
        %1429 = vmatpush1.msra.mxu0 %v1267
        %1430 = vmatprep.subr.mxu0 0.0
        %1431 = vmatpush1.msra.mxu0 %v1268
        %1432 = vmatprep.subr.mxu0 0.0
        %1433 = vmatpush1.msra.mxu0 %v1269
        %1434 = vmatprep.subr.mxu0 0.0
        %1435 = vmatpush1.msra.mxu0 %v1270
        %1436 = vmatprep.subr.mxu0 0.0
        %1437 = vmatpush1.msra.mxu0 %v1271
        %1438 = vmatprep.subr.mxu0 0.0
        %1439 = vmatpush1.msra.mxu0 0.0
        %1440 = vmatprep.subr.mxu0 0.0
        %1441 = vmatpush1.msra.mxu0 0.0
        %1442 = vmatprep.subr.mxu0 0.0
        %1443 = vmatpush1.msra.mxu0 0.0
        %1444 = vmatprep.subr.mxu0 0.0
        %1445 = vmatpush1.msra.mxu0 0.0
        %1446 = vmatprep.subr.mxu0 0.0
        %1447 = vmatpush1.msra.mxu0 0.0
        %1448 = vmatprep.subr.mxu0 0.0
        %1449 = vmatpush1.msra.mxu0 0.0
        %1450 = vmatprep.subr.mxu0 0.0
        %1451 = vmatpush1.msra.mxu0 0.0
        %1452 = vmatprep.subr.mxu0 0.0
        %1453 = vmatpush1.msra.mxu0 0.0
        %1454 = vmatprep.subr.mxu0 0.0
        %1455 = vmatpush1.msra.mxu0 0.0
        %1456 = vmatprep.subr.mxu0 0.0
        %1457 = vmatpush1.msra.mxu0 0.0
        %1458 = vmatprep.subr.mxu0 0.0
        %1459 = vmatpush1.msra.mxu0 0.0
        %1460 = vmatprep.subr.mxu0 0.0
        %1461 = vmatpush1.msra.mxu0 0.0
        %1462 = vmatprep.subr.mxu0 0.0
        %1463 = vmatpush1.msra.mxu0 0.0
        %1464 = vmatprep.subr.mxu0 0.0
        %1465 = vmatpush1.msra.mxu0 0.0
        %1466 = vmatprep.mubr.f32.mxu0 %v1274
        %1467 = vmatmul.mubr.f32.gmra.mrb[0].mxu0 %v1096
        %v1468 = vpop.f32.mrb[0].mxu0
        %v1469 = vadd.f32 %v1364, %v1468
        %v1470 = vpop.f32.mrb[0].mxu0
        %1471 = vmatprep.mubr.f32.mxu0 %v1277
        %1472 = vmatmul.mubr.f32.gmra.mrb[0].mxu0 %v1104
        %v1473 = vpop.f32.mrb[0].mxu0
        %v1474 = vadd.f32 %v1369, %v1473
        %v1475 = vpop.f32.mrb[0].mxu0
        %1476 = vmatprep.mubr.f32.mxu0 %v1280
        %1477 = vmatmul.mubr.f32.gmra.mrb[0].mxu0 %v1112
        %v1478 = vpop.f32.mrb[0].mxu0
        %v1479 = vadd.f32 %v1374, %v1478
        %v1480 = vpop.f32.mrb[0].mxu0
        %1481 = vmatprep.mubr.f32.mxu0 %v1283
        %1482 = vmatmul.mubr.f32.gmra.mrb[0].mxu0 %v1120
        %v1483 = vpop.f32.mrb[0].mxu0
        %v1484 = vadd.f32 %v1379, %v1483
        %v1485 = vpop.f32.mrb[0].mxu0
        %1486 = vmatprep.mubr.f32.mxu0 %v1286
        %1487 = vmatmul.mubr.f32.gmra.mrb[0].mxu0 %v1128
        %v1488 = vpop.f32.mrb[0].mxu0
        %v1489 = vadd.f32 %v1384, %v1488
        %v1490 = vpop.f32.mrb[0].mxu0
        %1491 = vmatprep.mubr.f32.mxu0 %v1289
        %1492 = vmatmul.mubr.f32.gmra.mrb[0].mxu0 %v1136
        %v1493 = vpop.f32.mrb[0].mxu0
        %v1494 = vadd.f32 %v1389, %v1493
        %v1495 = vpop.f32.mrb[0].mxu0
        %1496 = vmatprep.mubr.f32.mxu0 %v1292
        %1497 = vmatmul.mubr.f32.gmra.mrb[0].mxu0 %v1144
        %v1498 = vpop.f32.mrb[0].mxu0
        %v1499 = vadd.f32 %v1394, %v1498
        %v1500 = vpop.f32.mrb[0].mxu0
        %1501 = vmatprep.mubr.f32.mxu0 %v1295
        %1502 = vmatmul.mubr.f32.gmra.mrb[0].mxu0 %v1152
        %v1503 = vpop.f32.mrb[0].mxu0
        %v1504 = vadd.f32 %v1399, %v1503
        %v1505 = vpop.f32.mrb[0].mxu0
        %1506 = vdwg.mxu0
        %vm1507 = vcmask 539648
        %v1509 = vsel %vm1507, %v1205, 0
        %v1512 = vsel %vm1507, %v1206, 0
        %v1515 = vsel %vm1507, %v1207, 0
        %v1518 = vsel %vm1507, %v1208, 0
        %v1521 = vsel %vm1507, %v1209, 0
        %v1524 = vsel %vm1507, %v1210, 0
        %v1527 = vsel %vm1507, %v1211, 0
        %v1530 = vsel %vm1507, %v1212, 0
        %vm1532 = vcmask 1041408
        %v1534 = vsel %vm1532, %v1221, 0
        %1536 = vmatprep.subr.mxu0 0.0
        %1537 = vmatpush1.msra.mxu0 %v1213
        %1538 = vmatprep.subr.mxu0 0.0
        %1539 = vmatpush1.msra.mxu0 %v1214
        %1540 = vmatprep.subr.mxu0 0.0
        %1541 = vmatpush1.msra.mxu0 %v1215
        %1542 = vmatprep.subr.mxu0 0.0
        %1543 = vmatpush1.msra.mxu0 %v1216
        %1544 = vmatprep.subr.mxu0 0.0
        %1545 = vmatpush1.msra.mxu0 %v1217
        %1546 = vmatprep.subr.mxu0 0.0
        %1547 = vmatpush1.msra.mxu0 %v1218
        %1548 = vmatprep.subr.mxu0 0.0
        %1549 = vmatpush1.msra.mxu0 %v1219
        %1550 = vmatprep.subr.mxu0 0.0
        %1551 = vmatpush1.msra.mxu0 %v1220
        %1552 = vmatprep.subr.mxu0 0.0
        %1553 = vmatpush1.msra.mxu0 %v1534
        %1554 = vmatprep.subr.mxu0 0.0
        %1555 = vmatpush1.msra.mxu0 0.0
        %1556 = vmatprep.subr.mxu0 0.0
        %1557 = vmatpush1.msra.mxu0 0.0
        %1558 = vmatprep.subr.mxu0 0.0
        %1559 = vmatpush1.msra.mxu0 0.0
        %1560 = vmatprep.subr.mxu0 0.0
        %1561 = vmatpush1.msra.mxu0 0.0
        %1562 = vmatprep.subr.mxu0 0.0
        %1563 = vmatpush1.msra.mxu0 0.0
        %1564 = vmatprep.subr.mxu0 0.0
        %1565 = vmatpush1.msra.mxu0 0.0
        %1566 = vmatprep.subr.mxu0 0.0
        %1567 = vmatpush1.msra.mxu0 0.0
        %1568 = vmatprep.subr.mxu0 0.0
        %1569 = vmatpush1.msra.mxu0 0.0
        %1570 = vmatprep.subr.mxu0 0.0
        %1571 = vmatpush1.msra.mxu0 0.0
        %1572 = vmatprep.subr.mxu0 0.0
        %1573 = vmatpush1.msra.mxu0 0.0
        %1574 = vmatprep.subr.mxu0 0.0
        %1575 = vmatpush1.msra.mxu0 0.0
        %1576 = vmatprep.subr.mxu0 0.0
        %1577 = vmatpush1.msra.mxu0 0.0
        %1578 = vmatprep.subr.mxu0 0.0
        %1579 = vmatpush1.msra.mxu0 0.0
        %1580 = vmatprep.subr.mxu0 0.0
        %1581 = vmatpush1.msra.mxu0 0.0
        %1582 = vmatprep.subr.mxu0 0.0
        %1583 = vmatpush1.msra.mxu0 0.0
        %1584 = vmatprep.subr.mxu0 0.0
        %1585 = vmatpush1.msra.mxu0 0.0
        %1586 = vmatprep.subr.mxu0 0.0
        %1587 = vmatpush1.msra.mxu0 0.0
        %1588 = vmatprep.subr.mxu0 0.0
        %1589 = vmatpush1.msra.mxu0 0.0
        %1590 = vmatprep.subr.mxu0 0.0
        %1591 = vmatpush1.msra.mxu0 0.0
        %1592 = vmatprep.subr.mxu0 0.0
        %1593 = vmatpush1.msra.mxu0 0.0
        %1594 = vmatprep.subr.mxu0 0.0
        %1595 = vmatpush1.msra.mxu0 0.0
        %1596 = vmatprep.subr.mxu0 0.0
        %1597 = vmatpush1.msra.mxu0 0.0
        %1598 = vmatprep.subr.mxu0 0.0
        %1599 = vmatpush1.msra.mxu0 0.0
        %1600 = vmatprep.mubr.f32.mxu0 0.0
        %1601 = vmatmul.mubr.f32.gmra.mrb[0].mxu0 %v1509
        %v1602 = vpop.f32.mrb[0].mxu0
        %v1603 = vadd.f32 %v1469, %v1602
        %v1604 = vpop.f32.mrb[0].mxu0
        %1605 = vmatprep.mubr.f32.mxu0 0.0
        %1606 = vmatmul.mubr.f32.gmra.mrb[0].mxu0 %v1512
        %v1607 = vpop.f32.mrb[0].mxu0
        %v1608 = vadd.f32 %v1474, %v1607
        %v1609 = vpop.f32.mrb[0].mxu0
        %1610 = vmatprep.mubr.f32.mxu0 0.0
        %1611 = vmatmul.mubr.f32.gmra.mrb[0].mxu0 %v1515
        %v1612 = vpop.f32.mrb[0].mxu0
        %v1613 = vadd.f32 %v1479, %v1612
        %v1614 = vpop.f32.mrb[0].mxu0
        %1615 = vmatprep.mubr.f32.mxu0 0.0
        %1616 = vmatmul.mubr.f32.gmra.mrb[0].mxu0 %v1518
        %v1617 = vpop.f32.mrb[0].mxu0
        %v1618 = vadd.f32 %v1484, %v1617
        %v1619 = vpop.f32.mrb[0].mxu0
        %1620 = vmatprep.mubr.f32.mxu0 0.0
        %1621 = vmatmul.mubr.f32.gmra.mrb[0].mxu0 %v1521
        %v1622 = vpop.f32.mrb[0].mxu0
        %v1623 = vadd.f32 %v1489, %v1622
        %v1624 = vpop.f32.mrb[0].mxu0
        %1625 = vmatprep.mubr.f32.mxu0 0.0
        %1626 = vmatmul.mubr.f32.gmra.mrb[0].mxu0 %v1524
        %v1627 = vpop.f32.mrb[0].mxu0
        %v1628 = vadd.f32 %v1494, %v1627
        %v1629 = vpop.f32.mrb[0].mxu0
        %1630 = vmatprep.mubr.f32.mxu0 0.0
        %1631 = vmatmul.mubr.f32.gmra.mrb[0].mxu0 %v1527
        %v1632 = vpop.f32.mrb[0].mxu0
        %v1633 = vadd.f32 %v1499, %v1632
        %v1634 = vpop.f32.mrb[0].mxu0
        %1635 = vmatprep.mubr.f32.mxu0 0.0
        %1636 = vmatmul.mubr.f32.gmra.mrb[0].mxu0 %v1530
        %v1637 = vpop.f32.mrb[0].mxu0
        %v1638 = vadd.f32 %v1504, %v1637
        %v1639 = vpop.f32.mrb[0].mxu0
        %1640 = vdwg.mxu0
        %v1641 = vld [vmem:[%s2] sm:$0x1]
        %v1643 = vlaneseq
        %v1644 = vshrl.u32 %v1643, 7
        %v1645 = vsub.s32 0, %v1644
        %v1646 = vrot.slane %v1641, %v1645
        %v1648 = vadd.f32 %v1603, %v1646
        %v1649 = vadd.f32 %v1608, %v1646
        %v1650 = vadd.f32 %v1613, %v1646
        %v1651 = vadd.f32 %v1618, %v1646
        %v1652 = vadd.f32 %v1623, %v1646
        %v1653 = vadd.f32 %v1628, %v1646
        %v1654 = vadd.f32 %v1633, %v1646
        %v1655 = vadd.f32 %v1638, %v1646
        %1656 = vadd.xlane.f32.xlu0 %v1648
        %v1657 = vpop.xlane.xlu0 %1656
        %1658 = vadd.xlane.f32.xlu0 %v1649
        %v1659 = vpop.xlane.xlu0 %1658
        %1660 = vadd.xlane.f32.xlu0 %v1650
        %v1661 = vpop.xlane.xlu0 %1660
        %1662 = vadd.xlane.f32.xlu0 %v1651
        %v1663 = vpop.xlane.xlu0 %1662
        %1664 = vadd.xlane.f32.xlu0 %v1652
        %v1665 = vpop.xlane.xlu0 %1664
        %1666 = vadd.xlane.f32.xlu0 %v1653
        %v1667 = vpop.xlane.xlu0 %1666
        %1668 = vadd.xlane.f32.xlu0 %v1654
        %v1669 = vpop.xlane.xlu0 %1668
        %1670 = vadd.xlane.f32.xlu0 %v1655
        %v1671 = vpop.xlane.xlu0 %1670
        %v1672 = vmul.f32 %v1657, 0.0078125
        %v1673 = vmul.f32 %v1659, 0.0078125
        %v1674 = vmul.f32 %v1661, 0.0078125
        %v1675 = vmul.f32 %v1663, 0.0078125
        %v1676 = vmul.f32 %v1665, 0.0078125
        %v1677 = vmul.f32 %v1667, 0.0078125
        %v1678 = vmul.f32 %v1669, 0.0078125
        %v1679 = vmul.f32 %v1671, 0.0078125
        %v1680 = vsub.f32 %v1648, %v1672
        %v1681 = vsub.f32 %v1649, %v1673
        %v1682 = vsub.f32 %v1650, %v1674
        %v1683 = vsub.f32 %v1651, %v1675
        %v1684 = vsub.f32 %v1652, %v1676
        %v1685 = vsub.f32 %v1653, %v1677
        %v1686 = vsub.f32 %v1654, %v1678
        %v1687 = vsub.f32 %v1655, %v1679
        %v1688 = vmul.f32 %v1680, %v1680
        %v1689 = vmul.f32 %v1681, %v1681
        %v1690 = vmul.f32 %v1682, %v1682
        %v1691 = vmul.f32 %v1683, %v1683
        %v1692 = vmul.f32 %v1684, %v1684
        %v1693 = vmul.f32 %v1685, %v1685
        %v1694 = vmul.f32 %v1686, %v1686
        %v1695 = vmul.f32 %v1687, %v1687
        %1696 = vadd.xlane.f32.xlu0 %v1688
        %v1697 = vpop.xlane.xlu0 %1696
        %1698 = vadd.xlane.f32.xlu0 %v1689
        %v1699 = vpop.xlane.xlu0 %1698
        %1700 = vadd.xlane.f32.xlu0 %v1690
        %v1701 = vpop.xlane.xlu0 %1700
        %1702 = vadd.xlane.f32.xlu0 %v1691
        %v1703 = vpop.xlane.xlu0 %1702
        %1704 = vadd.xlane.f32.xlu0 %v1692
        %v1705 = vpop.xlane.xlu0 %1704
        %1706 = vadd.xlane.f32.xlu0 %v1693
        %v1707 = vpop.xlane.xlu0 %1706
        %1708 = vadd.xlane.f32.xlu0 %v1694
        %v1709 = vpop.xlane.xlu0 %1708
        %1710 = vadd.xlane.f32.xlu0 %v1695
        %v1711 = vpop.xlane.xlu0 %1710
        %v1712 = vmul.f32 %v1697, 0.0078125
        %v1713 = vmul.f32 %v1699, 0.0078125
        %v1714 = vmul.f32 %v1701, 0.0078125
        %v1715 = vmul.f32 %v1703, 0.0078125
        %v1716 = vmul.f32 %v1705, 0.0078125
        %v1717 = vmul.f32 %v1707, 0.0078125
        %v1718 = vmul.f32 %v1709, 0.0078125
        %v1719 = vmul.f32 %v1711, 0.0078125
        %v1720 = vadd.f32 %v1712, 1e-05
        %v1721 = vadd.f32 %v1713, 1e-05
        %v1722 = vadd.f32 %v1714, 1e-05
        %v1723 = vadd.f32 %v1715, 1e-05
        %v1724 = vadd.f32 %v1716, 1e-05
        %v1725 = vadd.f32 %v1717, 1e-05
        %v1726 = vadd.f32 %v1718, 1e-05
        %v1727 = vadd.f32 %v1719, 1e-05
        %v1728 = vrsqrt.pop %v1720
        %v1729 = vrsqrt.pop %v1721
        %v1730 = vrsqrt.pop %v1722
        %v1731 = vrsqrt.pop %v1723
        %v1732 = vrsqrt.pop %v1724
        %v1733 = vrsqrt.pop %v1725
        %v1734 = vrsqrt.pop %v1726
        %v1735 = vrsqrt.pop %v1727
        %v1736 = vmul.f32 %v1680, %v1728
        %v1737 = vmul.f32 %v1681, %v1729
        %v1738 = vmul.f32 %v1682, %v1730
        %v1739 = vmul.f32 %v1683, %v1731
        %v1740 = vmul.f32 %v1684, %v1732
        %v1741 = vmul.f32 %v1685, %v1733
        %v1742 = vmul.f32 %v1686, %v1734
        %v1743 = vmul.f32 %v1687, %v1735
        %v1744 = vld [vmem:[%s4] sm:$0x1]
        %v1746 = vlaneseq
        %v1747 = vshrl.u32 %v1746, 7
        %v1748 = vsub.s32 0, %v1747
        %v1749 = vrot.slane %v1744, %v1748
        %v1751 = vmul.f32 %v1736, %v1749
        %v1752 = vmul.f32 %v1737, %v1749
        %v1753 = vmul.f32 %v1738, %v1749
        %v1754 = vmul.f32 %v1739, %v1749
        %v1755 = vmul.f32 %v1740, %v1749
        %v1756 = vmul.f32 %v1741, %v1749
        %v1757 = vmul.f32 %v1742, %v1749
        %v1758 = vmul.f32 %v1743, %v1749
        %v1759 = vld [vmem:[%s5] sm:$0x1]
        %v1761 = vlaneseq
        %v1762 = vshrl.u32 %v1761, 7
        %v1763 = vsub.s32 0, %v1762
        %v1764 = vrot.slane %v1759, %v1763
        %v1766 = vadd.f32 %v1751, %v1764
        %v1767 = vadd.f32 %v1752, %v1764
        %v1768 = vadd.f32 %v1753, %v1764
        %v1769 = vadd.f32 %v1754, %v1764
        %v1770 = vadd.f32 %v1755, %v1764
        %v1771 = vadd.f32 %v1756, %v1764
        %v1772 = vadd.f32 %v1757, %v1764
        %v1773 = vadd.f32 %v1758, %v1764
        %1774 = vst [vmem:[%s260] sm:$0xff] %v1766
        %1775 = vst [vmem:[%s260 + $0x8] sm:$0xff] %v1767
        %1776 = vst [vmem:[%s260 + $0x10] sm:$0xff] %v1768
        %1777 = vst [vmem:[%s260 + $0x18] sm:$0xff] %v1769
        %1778 = vst [vmem:[%s260 + $0x20] sm:$0xff] %v1770
        %1779 = vst [vmem:[%s260 + $0x28] sm:$0xff] %v1771
        %1780 = vst [vmem:[%s260 + $0x30] sm:$0xff] %v1772
        %1781 = vst [vmem:[%s260 + $0x38] sm:$0xff] %v1773
        %s1782 = sand.u32 %s160, 1
        %s1783 = scalar_lea.sflag [#allocation4], %s1782
        %s1784 = sand.u32 %s160, 1
        %s1785 = smul.addr %s1784, 64
        %s1786 = scalar_lea.vmem [#allocation5], %s1785
        // Predicated region
        $region49: #{tpu_custom_call.1} parent=43 // pred_check
          %p1787 = pneg %p170
        $region50: #{tpu_custom_call.1} parent=43 // pred_check_branch
          %1789 = sbr.rel (%p1787) target = $region52
        $region51: #{tpu_custom_call.1} parent=43 // pred_region
          %s1790 = smul.u32 8, %s21
          %s1792 = ssub.s32 1024, 1024
          %1793 = vsyncadd %s1783, %s1792
          %s1794 = smul.addr %s1790, 128
          %s1795 = scalar_lea.hbm %s6, %s1794
          %s1796 = sshll.u32 %s1786, 4
          %s1797 = int_to_ptr.vmem [resolvable:$true] %s1796
          %1802 = dma.vmem_to_hbm [thread:$0]  %s1797, 1024, %s1795, %s1783, 128, 128, 8
        $region52: #{tpu_custom_call.1} parent=43 // pred_fallthru
          _
      $region44: #{tpu_custom_call.1} parent=5 // pred_fallthru
        _
      %p1803 = scmp.le.s32.totalorder 2, %s16
      // Predicated region
      $region53: #{tpu_custom_call.1} parent=5 // pred_check
        %p1804 = pneg %p1803
      $region54: #{tpu_custom_call.1} parent=5 // pred_check_branch
        %1806 = sbr.rel (%p1804) target = $region56
      $region55: #{tpu_custom_call.1} parent=5 // pred_region
        %s1807 = ssub.s32 %s16, 2
        // Predicated region
        $region57: #{tpu_custom_call.1} parent=55 // pred_check
          %p1808 = pneg %p176
        $region58: #{tpu_custom_call.1} parent=55 // pred_check_branch
          %1810 = sbr.rel (%p1808) target = $region60
        $region59: #{tpu_custom_call.1} parent=55 // pred_region
          %s1811 = sand.u32 %s161, 1
          %s1812 = scalar_lea.sflag [#allocation4], %s1811
          %s1813 = sand.u32 %s161, 1
          %s1814 = smul.addr %s1813, 64
          %s1815 = scalar_lea.vmem [#allocation5], %s1814
          %1816 = dma.done %s1812, 1024
        $region60: #{tpu_custom_call.1} parent=55 // pred_fallthru
          _
      $region56: #{tpu_custom_call.1} parent=5 // pred_fallthru
        _
    $region6: #{tpu_custom_call.1} parent=1 // loop_footer
      %s20 = sadd.s32 1, %s16
    $region7: #{tpu_custom_call.1} parent=1 // loop_footer_branch
      %15 = sbr.rel target = $region3
    $region8: #{tpu_custom_call.1} parent=1 // loop_exit
      _
    %1817 = vsyncpa [#allocation3], 1
    %s1818 = scalar_lea.sflag [#allocation3], 1
    %1819 = vsyncpa %s1818, 1
    %1820 = vsyncpa [#allocation4], 1
    %s1821 = scalar_lea.sflag [#allocation4], 1
    %1822 = vsyncpa %s1821, 1

</llo_original>
